<compile_context>
chip_gen: v5e
topology: v5e:2x2
jax: 0.10.0
libtpu: 0.0.40
codegen_flags: <defaults>
</compile_context>

<pallas_src>
import math
import functools

import jax
import jax.numpy as jnp
from jax.experimental import pallas as pl
from jax.experimental.pallas import tpu as pltpu

LN_EPS = 1e-12  # DistilBERT LayerNorm eps


def _layer_norm(x, w, b):
    mu = jnp.mean(x, axis=-1, keepdims=True)
    var = jnp.mean((x - mu) ** 2, axis=-1, keepdims=True)
    return (x - mu) * jax.lax.rsqrt(var + LN_EPS) * w + b


def transformer_stack_kernel(
    x_ref, mask_ref, hmask_ref,
    qw_ref, qb_ref, kw_ref, kb_ref, vw_ref, vb_ref, ow_ref, ob_ref,
    ln1w_ref, ln1b_ref,
    l1w_ref, l1b_ref, l2w_ref, l2b_ref,
    ln2w_ref, ln2b_ref,
    out_ref,
    hid_ref, ctx_ref,
    *, n_heads, head_dim, apply_head_mask):
    layer = pl.program_id(1)

    # Load the embedded input once, at the first layer of this batch element.
    @pl.when(layer == 0)
    def _():
        hid_ref[...] = x_ref[0]

    h = hid_ref[...]                      # (seq, dim) f32 hidden state carry
    h_b = h.astype(jnp.bfloat16)          # bf16 operand for MXU matmuls

    # QKV projections (bf16 x bf16 -> f32 accumulate).  1/sqrt(head_dim) is
    # already folded into qw/qb.
    q = jnp.dot(h_b, qw_ref[0], preferred_element_type=jnp.float32) + qb_ref[0]
    k = jnp.dot(h_b, kw_ref[0], preferred_element_type=jnp.float32) + kb_ref[0]
    v = jnp.dot(h_b, vw_ref[0], preferred_element_type=jnp.float32) + vb_ref[0]
    q_b = q.astype(jnp.bfloat16)
    k_b = k.astype(jnp.bfloat16)
    v_b = v.astype(jnp.bfloat16)

    masked = (mask_ref[0] == 0.0)         # (1, seq); 0.0 = masked out
    neg = jnp.finfo(jnp.float32).min
    hm = hmask_ref[0]                     # (1, n_heads)

    # Per-head attention; contexts land in a (seq, dim) VMEM scratch so that a
    # single K=dim output projection can be issued afterwards.
    for hh in range(n_heads):
        lo = hh * head_dim
        hi = lo + head_dim
        qh = q_b[:, lo:hi]
        kh = k_b[:, lo:hi]
        vh = v_b[:, lo:hi]
        # q @ k^T without materializing a transpose: contract the last dims.
        s = jax.lax.dot_general(qh, kh, (((1,), (1,)), ((), ())),
                                preferred_element_type=jnp.float32)   # (seq, seq)
        s = jnp.where(masked, neg, s)
        s = s - jnp.max(s, axis=-1, keepdims=True)
        p = jnp.exp(s)
        p = p * pl.reciprocal(jnp.sum(p, axis=-1, keepdims=True), approx=True)
        ctx_h = jnp.dot(p.astype(jnp.bfloat16), vh,
                        preferred_element_type=jnp.float32)           # (seq, hd)
        if apply_head_mask:
            ctx_h = ctx_h * hm[0:1, hh:hh + 1]
        ctx_ref[:, lo:hi] = ctx_h.astype(jnp.bfloat16)

    # Single fused output projection over the full feature dim (K = dim).
    sa = jnp.dot(ctx_ref[...], ow_ref[0],
                 preferred_element_type=jnp.float32) + ob_ref[0]

    # residual + sa_layer_norm (f32)
    h1 = _layer_norm(sa + h, ln1w_ref[0], ln1b_ref[0])

    # FFN: lin1 -> exact GELU -> lin2 (bf16 matmuls, f32 accumulate/activations)
    f = jnp.dot(h1.astype(jnp.bfloat16), l1w_ref[0],
                preferred_element_type=jnp.float32) + l1b_ref[0]
    f = 0.5 * f * (1.0 + jax.lax.erf(f * (1.0 / math.sqrt(2.0))))
    f = jnp.dot(f.astype(jnp.bfloat16), l2w_ref[0],
                preferred_element_type=jnp.float32) + l2b_ref[0]

    # residual + output_layer_norm
    new_h = _layer_norm(f + h1, ln2w_ref[0], ln2b_ref[0])
    hid_ref[...] = new_h

    # Only the top layer's hidden state is the module output.
    @pl.when(layer == pl.num_programs(1) - 1)
    def _():
        out_ref[0] = new_h


def init_params(key, n_layers, dim, hidden_dim):
    """Deterministic synthetic parameters, stacked with a leading layer axis.

    Linear weights are stored pre-transposed as (in_features, out_features) so
    the kernel computes y = x @ W + b (== torch's x @ W.T + b).
    """
    keys = jax.random.split(key, 6)

    def w(k, i, o):
        return (0.02 * jax.random.normal(k, (n_layers, i, o))).astype(jnp.float32)

    def zeros(o):
        return jnp.zeros((n_layers, 1, o), jnp.float32)

    def ones(o):
        return jnp.ones((n_layers, 1, o), jnp.float32)

    return dict(
        qw=w(keys[0], dim, dim), qb=zeros(dim),
        kw=w(keys[1], dim, dim), kb=zeros(dim),
        vw=w(keys[2], dim, dim), vb=zeros(dim),
        ow=w(keys[3], dim, dim), ob=zeros(dim),
        ln1w=ones(dim), ln1b=zeros(dim),
        l1w=w(keys[4], dim, hidden_dim), l1b=zeros(hidden_dim),
        l2w=w(keys[5], hidden_dim, dim), l2b=zeros(dim),
        ln2w=ones(dim), ln2b=zeros(dim),
    )


def transformer_forward(x, attn_mask, head_mask, params, n_heads):
    """x: (bs, seq, dim) f32; attn_mask: (bs, seq); head_mask: (n_layers,1,n_heads)."""
    bs, seq, dim = x.shape
    n_layers = params["qw"].shape[0]
    hidden_dim = params["l1w"].shape[-1]
    head_dim = dim // n_heads
    scale = 1.0 / math.sqrt(head_dim)

    apply_head_mask = head_mask is not None
    if head_mask is None:
        head_mask = jnp.ones((n_layers, 1, n_heads), jnp.float32)
    head_mask = head_mask.astype(jnp.float32)

    mask3 = attn_mask.reshape(bs, 1, seq).astype(jnp.float32)

    # Fold the attention scale into the Q projection; stage weights as bf16
    # (biases / LN params stay f32 for accumulation accuracy).
    to_bf16 = lambda a: a.astype(jnp.bfloat16)
    qw = to_bf16(params["qw"] * scale)
    qb = params["qb"] * scale
    kw, vw, ow = to_bf16(params["kw"]), to_bf16(params["vw"]), to_bf16(params["ow"])
    l1w, l2w = to_bf16(params["l1w"]), to_bf16(params["l2w"])

    kernel = functools.partial(
        transformer_stack_kernel,
        n_heads=n_heads, head_dim=head_dim, apply_head_mask=apply_head_mask)

    def layer_spec(shape):
        # Stacked per-layer tensor: indexed by the layer grid coordinate, so
        # BlockSpec double-buffering prefetches layer l+1 weights during layer l.
        return pl.BlockSpec((1,) + tuple(shape[1:]), lambda b, l: (l, 0, 0))

    in_specs = [
        pl.BlockSpec((1, seq, dim), lambda b, l: (b, 0, 0)),   # x (only read at l==0)
        pl.BlockSpec((1, 1, seq), lambda b, l: (b, 0, 0)),     # attention mask
        layer_spec(head_mask.shape),                           # head mask
        layer_spec(qw.shape), layer_spec(qb.shape),
        layer_spec(kw.shape), layer_spec(params["kb"].shape),
        layer_spec(vw.shape), layer_spec(params["vb"].shape),
        layer_spec(ow.shape), layer_spec(params["ob"].shape),
        layer_spec(params["ln1w"].shape), layer_spec(params["ln1b"].shape),
        layer_spec(l1w.shape), layer_spec(params["l1b"].shape),
        layer_spec(l2w.shape), layer_spec(params["l2b"].shape),
        layer_spec(params["ln2w"].shape), layer_spec(params["ln2b"].shape),
    ]

    out = pl.pallas_call(
        kernel,
        out_shape=jax.ShapeDtypeStruct((bs, seq, dim), jnp.float32),
        grid=(bs, n_layers),
        in_specs=in_specs,
        out_specs=pl.BlockSpec((1, seq, dim), lambda b, l: (b, 0, 0)),
        scratch_shapes=[
            pltpu.VMEM((seq, dim), jnp.float32),    # hidden-state carry
            pltpu.VMEM((seq, dim), jnp.bfloat16),   # per-head context buffer
        ],
        compiler_params=pltpu.CompilerParams(
            dimension_semantics=("parallel", "arbitrary"),
            vmem_limit_bytes=32 * 1024 * 1024,
        ),
    )(x, mask3, head_mask,
      qw, qb, kw, params["kb"], vw, params["vb"], ow, params["ob"],
      params["ln1w"], params["ln1b"],
      l1w, params["l1b"], l2w, params["l2b"],
      params["ln2w"], params["ln2b"])

    # return_dict falsy, no output_attentions / output_hidden_states:
    # PyTorch module returns (hidden_state,); we return hidden_state.
    # TODO(synk): output_attentions / output_hidden_states tuple variants are
    # intermediates of this same kernel and are not materialized.
    return out


if __name__ == "__main__":
    bs, seq, dim = 2, 8, 32
    n_heads, hidden_dim, n_layers = 4, 64, 2

    key = jax.random.PRNGKey(0)
    kx, kp = jax.random.split(key)

    x = jax.random.normal(kx, (bs, seq, dim), dtype=jnp.float32)
    attn_mask = jnp.ones((bs, seq), jnp.float32).at[1, -2:].set(0.0)
    head_mask = jnp.ones((n_layers, 1, n_heads), jnp.float32)

    params = init_params(kp, n_layers, dim, hidden_dim)

    out = transformer_forward(x, attn_mask, head_mask, params, n_heads)
    jax.block_until_ready(out)
    assert out.shape == (bs, seq, dim)
    print("KERNEL_OK")
</pallas_src>

<mosaic_0001>
module attributes {stable_mosaic.version = 11 : i64} {
  func.func @transformer_stack_kernel(%arg0: i32, %arg1: i32, %arg2: memref<1x8x32xf32, #tpu.memory_space<vmem>>, %arg3: memref<1x1x8xf32, #tpu.memory_space<vmem>>, %arg4: memref<1x1x4xf32, #tpu.memory_space<vmem>>, %arg5: memref<1x32x32xbf16, #tpu.memory_space<vmem>>, %arg6: memref<1x1x32xf32, #tpu.memory_space<vmem>>, %arg7: memref<1x32x32xbf16, #tpu.memory_space<vmem>>, %arg8: memref<1x1x32xf32, #tpu.memory_space<vmem>>, %arg9: memref<1x32x32xbf16, #tpu.memory_space<vmem>>, %arg10: memref<1x1x32xf32, #tpu.memory_space<vmem>>, %arg11: memref<1x32x32xbf16, #tpu.memory_space<vmem>>, %arg12: memref<1x1x32xf32, #tpu.memory_space<vmem>>, %arg13: memref<1x1x32xf32, #tpu.memory_space<vmem>>, %arg14: memref<1x1x32xf32, #tpu.memory_space<vmem>>, %arg15: memref<1x32x64xbf16, #tpu.memory_space<vmem>>, %arg16: memref<1x1x64xf32, #tpu.memory_space<vmem>>, %arg17: memref<1x64x32xbf16, #tpu.memory_space<vmem>>, %arg18: memref<1x1x32xf32, #tpu.memory_space<vmem>>, %arg19: memref<1x1x32xf32, #tpu.memory_space<vmem>>, %arg20: memref<1x1x32xf32, #tpu.memory_space<vmem>>, %arg21: memref<1x8x32xf32, #tpu.memory_space<vmem>>, %arg22: memref<8x32xf32, #tpu.memory_space<vmem>>, %arg23: memref<8x32xbf16, #tpu.memory_space<vmem>>) attributes {dimension_semantics = [#tpu.dimension_semantics<parallel>, #tpu.dimension_semantics<arbitrary>], iteration_bounds = array<i64: 2, 2>, scalar_prefetch = 0 : i64, scratch_operands = 2 : i64, tpu.core_type = #tpu.core_type<tc>, window_params = [{transform_indices = @transform_0, window_bounds = array<i64: 1, 8, 32>}, {transform_indices = @transform_1, window_bounds = array<i64: 1, 1, 8>}, {transform_indices = @transform_2, window_bounds = array<i64: 1, 1, 4>}, {transform_indices = @transform_3, window_bounds = array<i64: 1, 32, 32>}, {transform_indices = @transform_4, window_bounds = array<i64: 1, 1, 32>}, {transform_indices = @transform_5, window_bounds = array<i64: 1, 32, 32>}, {transform_indices = @transform_6, window_bounds = array<i64: 1, 1, 32>}, {transform_indices = @transform_7, window_bounds = array<i64: 1, 32, 32>}, {transform_indices = @transform_8, window_bounds = array<i64: 1, 1, 32>}, {transform_indices = @transform_9, window_bounds = array<i64: 1, 32, 32>}, {transform_indices = @transform_10, window_bounds = array<i64: 1, 1, 32>}, {transform_indices = @transform_11, window_bounds = array<i64: 1, 1, 32>}, {transform_indices = @transform_12, window_bounds = array<i64: 1, 1, 32>}, {transform_indices = @transform_13, window_bounds = array<i64: 1, 32, 64>}, {transform_indices = @transform_14, window_bounds = array<i64: 1, 1, 64>}, {transform_indices = @transform_15, window_bounds = array<i64: 1, 64, 32>}, {transform_indices = @transform_16, window_bounds = array<i64: 1, 1, 32>}, {transform_indices = @transform_17, window_bounds = array<i64: 1, 1, 32>}, {transform_indices = @transform_18, window_bounds = array<i64: 1, 1, 32>}, {transform_indices = @transform_19, window_bounds = array<i64: 1, 8, 32>}]} {
    %c0_i32 = arith.constant 0 : i32
    %0 = arith.cmpi eq, %arg1, %c0_i32 : i32
    %1 = arith.extui %0 : i1 to i32
    %c0_i32_0 = arith.constant 0 : i32
    %2 = arith.cmpi ne, %1, %c0_i32_0 : i32
    scf.if %2 {
      %c0_105 = arith.constant 0 : index
      %c0_106 = arith.constant 0 : index
      %c0_107 = arith.constant 0 : index
      %225 = vector.load %arg2[%c0_105, %c0_106, %c0_107] : memref<1x8x32xf32, #tpu.memory_space<vmem>>, vector<1x8x32xf32>
      %226 = vector.shape_cast %225 : vector<1x8x32xf32> to vector<8x32xf32>
      %c0_108 = arith.constant 0 : index
      %c0_109 = arith.constant 0 : index
      %227 = vector.load %arg22[%c0_108, %c0_109] : memref<8x32xf32, #tpu.memory_space<vmem>>, vector<8x32xf32>
      tpu.vector_store %arg22[%c0_108, %c0_109], %226 {strides = array<i32>} : memref<8x32xf32, #tpu.memory_space<vmem>>, vector<8x32xf32>,
    } else {
    }
    %c0 = arith.constant 0 : index
    %c0_1 = arith.constant 0 : index
    %3 = vector.load %arg22[%c0, %c0_1] : memref<8x32xf32, #tpu.memory_space<vmem>>, vector<8x32xf32>
    %4 = arith.truncf %3 : vector<8x32xf32> to vector<8x32xbf16>
    %c0_2 = arith.constant 0 : index
    %c0_3 = arith.constant 0 : index
    %c0_4 = arith.constant 0 : index
    %5 = vector.load %arg5[%c0_2, %c0_3, %c0_4] : memref<1x32x32xbf16, #tpu.memory_space<vmem>>, vector<1x32x32xbf16>
    %6 = vector.shape_cast %5 : vector<1x32x32xbf16> to vector<32x32xbf16>
    %cst = arith.constant dense<0.000000e+00> : vector<8x32xf32>
    %7 = tpu.matmul %4, %6, %cst {dimension_numbers = #tpu.dot_dimension_numbers<[1], [0], [0], [1], [0, 0, 1, 1], [], []>} : vector<8x32xbf16>, vector<32x32xbf16>, vector<8x32xf32> -> vector<8x32xf32>
    %c0_5 = arith.constant 0 : index
    %c0_6 = arith.constant 0 : index
    %c0_7 = arith.constant 0 : index
    %8 = vector.load %arg6[%c0_5, %c0_6, %c0_7] : memref<1x1x32xf32, #tpu.memory_space<vmem>>, vector<1x1x32xf32>
    %9 = vector.shape_cast %8 : vector<1x1x32xf32> to vector<1x32xf32>
    %10 = vector.broadcast %9 : vector<1x32xf32> to vector<8x32xf32>
    %11 = arith.addf %7, %10 : vector<8x32xf32>
    %c0_8 = arith.constant 0 : index
    %c0_9 = arith.constant 0 : index
    %c0_10 = arith.constant 0 : index
    %12 = vector.load %arg7[%c0_8, %c0_9, %c0_10] : memref<1x32x32xbf16, #tpu.memory_space<vmem>>, vector<1x32x32xbf16>
    %13 = vector.shape_cast %12 : vector<1x32x32xbf16> to vector<32x32xbf16>
    %cst_11 = arith.constant dense<0.000000e+00> : vector<8x32xf32>
    %14 = tpu.matmul %4, %13, %cst_11 {dimension_numbers = #tpu.dot_dimension_numbers<[1], [0], [0], [1], [0, 0, 1, 1], [], []>} : vector<8x32xbf16>, vector<32x32xbf16>, vector<8x32xf32> -> vector<8x32xf32>
    %c0_12 = arith.constant 0 : index
    %c0_13 = arith.constant 0 : index
    %c0_14 = arith.constant 0 : index
    %15 = vector.load %arg8[%c0_12, %c0_13, %c0_14] : memref<1x1x32xf32, #tpu.memory_space<vmem>>, vector<1x1x32xf32>
    %16 = vector.shape_cast %15 : vector<1x1x32xf32> to vector<1x32xf32>
    %17 = vector.broadcast %16 : vector<1x32xf32> to vector<8x32xf32>
    %18 = arith.addf %14, %17 : vector<8x32xf32>
    %c0_15 = arith.constant 0 : index
    %c0_16 = arith.constant 0 : index
    %c0_17 = arith.constant 0 : index
    %19 = vector.load %arg9[%c0_15, %c0_16, %c0_17] : memref<1x32x32xbf16, #tpu.memory_space<vmem>>, vector<1x32x32xbf16>
    %20 = vector.shape_cast %19 : vector<1x32x32xbf16> to vector<32x32xbf16>
    %cst_18 = arith.constant dense<0.000000e+00> : vector<8x32xf32>
    %21 = tpu.matmul %4, %20, %cst_18 {dimension_numbers = #tpu.dot_dimension_numbers<[1], [0], [0], [1], [0, 0, 1, 1], [], []>} : vector<8x32xbf16>, vector<32x32xbf16>, vector<8x32xf32> -> vector<8x32xf32>
    %c0_19 = arith.constant 0 : index
    %c0_20 = arith.constant 0 : index
    %c0_21 = arith.constant 0 : index
    %22 = vector.load %arg10[%c0_19, %c0_20, %c0_21] : memref<1x1x32xf32, #tpu.memory_space<vmem>>, vector<1x1x32xf32>
    %23 = vector.shape_cast %22 : vector<1x1x32xf32> to vector<1x32xf32>
    %24 = vector.broadcast %23 : vector<1x32xf32> to vector<8x32xf32>
    %25 = arith.addf %21, %24 : vector<8x32xf32>
    %26 = arith.truncf %11 : vector<8x32xf32> to vector<8x32xbf16>
    %27 = arith.truncf %18 : vector<8x32xf32> to vector<8x32xbf16>
    %28 = arith.truncf %25 : vector<8x32xf32> to vector<8x32xbf16>
    %c0_22 = arith.constant 0 : index
    %c0_23 = arith.constant 0 : index
    %c0_24 = arith.constant 0 : index
    %29 = vector.load %arg3[%c0_22, %c0_23, %c0_24] : memref<1x1x8xf32, #tpu.memory_space<vmem>>, vector<1x1x8xf32>
    %30 = vector.shape_cast %29 : vector<1x1x8xf32> to vector<1x8xf32>
    %cst_25 = arith.constant 0.000000e+00 : f32
    %31 = vector.broadcast %cst_25 : f32 to vector<1x8xf32>
    %32 = arith.cmpf oeq, %30, %31 : vector<1x8xf32>
    %c0_26 = arith.constant 0 : index
    %c0_27 = arith.constant 0 : index
    %c0_28 = arith.constant 0 : index
    %33 = vector.load %arg4[%c0_26, %c0_27, %c0_28] : memref<1x1x4xf32, #tpu.memory_space<vmem>>, vector<1x1x4xf32>
    %34 = vector.shape_cast %33 : vector<1x1x4xf32> to vector<1x4xf32>
    %35 = vector.extract_strided_slice %26 {offsets = [0, 0], sizes = [8, 8], strides = [1, 1]} : vector<8x32xbf16> to vector<8x8xbf16>
    %36 = vector.extract_strided_slice %27 {offsets = [0, 0], sizes = [8, 8], strides = [1, 1]} : vector<8x32xbf16> to vector<8x8xbf16>
    %37 = vector.extract_strided_slice %28 {offsets = [0, 0], sizes = [8, 8], strides = [1, 1]} : vector<8x32xbf16> to vector<8x8xbf16>
    %cst_29 = arith.constant dense<0.000000e+00> : vector<8x8xf32>
    %38 = tpu.matmul %35, %36, %cst_29 {dimension_numbers = #tpu.dot_dimension_numbers<[1], [1], [0], [0], [0, 0, 1, 0], [], []>} : vector<8x8xbf16>, vector<8x8xbf16>, vector<8x8xf32> -> vector<8x8xf32>
    %cst_30 = arith.constant -3.40282347E+38 : f32
    %39 = vector.shape_cast %32 : vector<1x8xi1> to vector<1x8xi1>
    %40 = vector.broadcast %39 : vector<1x8xi1> to vector<8x8xi1>
    %41 = vector.broadcast %cst_30 : f32 to vector<8x8xf32>
    %42 = arith.select %40, %41, %38 : vector<8x8xi1>, vector<8x8xf32>
    %cst_31 = arith.constant dense<0xFF800000> : vector<8xf32>
    %43 = vector.multi_reduction <maximumf>, %42, %cst_31 [1] : vector<8x8xf32> to vector<8xf32>
    %44 = vector.shape_cast %43 : vector<8xf32> to vector<8x1xf32>
    %45 = vector.broadcast %44 : vector<8x1xf32> to vector<8x8xf32>
    %46 = arith.subf %42, %45 : vector<8x8xf32>
    %47 = math.exp %46 : vector<8x8xf32>
    %cst_32 = arith.constant dense<0.000000e+00> : vector<8xf32>
    %48 = vector.multi_reduction <add>, %47, %cst_32 [1] : vector<8x8xf32> to vector<8xf32>
    %49 = vector.shape_cast %48 : vector<8xf32> to vector<8x1xf32>
    %50 = tpu.reciprocal %49 {approx = true} : vector<8x1xf32> -> vector<8x1xf32>
    %51 = vector.broadcast %50 : vector<8x1xf32> to vector<8x8xf32>
    %52 = arith.mulf %47, %51 : vector<8x8xf32>
    %53 = arith.truncf %52 : vector<8x8xf32> to vector<8x8xbf16>
    %cst_33 = arith.constant dense<0.000000e+00> : vector<8x8xf32>
    %54 = tpu.matmul %53, %37, %cst_33 {dimension_numbers = #tpu.dot_dimension_numbers<[1], [0], [0], [1], [0, 0, 1, 1], [], []>} : vector<8x8xbf16>, vector<8x8xbf16>, vector<8x8xf32> -> vector<8x8xf32>
    %55 = vector.extract_strided_slice %34 {offsets = [0, 0], sizes = [1, 1], strides = [1, 1]} : vector<1x4xf32> to vector<1x1xf32>
    %56 = vector.broadcast %55 : vector<1x1xf32> to vector<8x8xf32>
    %57 = arith.mulf %54, %56 : vector<8x8xf32>
    %58 = arith.truncf %57 : vector<8x8xf32> to vector<8x8xbf16>
    %c0_34 = arith.constant 0 : index
    %c0_35 = arith.constant 0 : index
    %59 = vector.load %arg23[%c0_34, %c0_35] : memref<8x32xbf16, #tpu.memory_space<vmem>>, vector<8x8xbf16>
    tpu.vector_store %arg23[%c0_34, %c0_35], %58 {strides = array<i32>} : memref<8x32xbf16, #tpu.memory_space<vmem>>, vector<8x8xbf16>,
    %60 = vector.extract_strided_slice %26 {offsets = [0, 8], sizes = [8, 8], strides = [1, 1]} : vector<8x32xbf16> to vector<8x8xbf16>
    %61 = vector.extract_strided_slice %27 {offsets = [0, 8], sizes = [8, 8], strides = [1, 1]} : vector<8x32xbf16> to vector<8x8xbf16>
    %62 = vector.extract_strided_slice %28 {offsets = [0, 8], sizes = [8, 8], strides = [1, 1]} : vector<8x32xbf16> to vector<8x8xbf16>
    %cst_36 = arith.constant dense<0.000000e+00> : vector<8x8xf32>
    %63 = tpu.matmul %60, %61, %cst_36 {dimension_numbers = #tpu.dot_dimension_numbers<[1], [1], [0], [0], [0, 0, 1, 0], [], []>} : vector<8x8xbf16>, vector<8x8xbf16>, vector<8x8xf32> -> vector<8x8xf32>
    %cst_37 = arith.constant -3.40282347E+38 : f32
    %64 = vector.shape_cast %32 : vector<1x8xi1> to vector<1x8xi1>
    %65 = vector.broadcast %64 : vector<1x8xi1> to vector<8x8xi1>
    %66 = vector.broadcast %cst_37 : f32 to vector<8x8xf32>
    %67 = arith.select %65, %66, %63 : vector<8x8xi1>, vector<8x8xf32>
    %cst_38 = arith.constant dense<0xFF800000> : vector<8xf32>
    %68 = vector.multi_reduction <maximumf>, %67, %cst_38 [1] : vector<8x8xf32> to vector<8xf32>
    %69 = vector.shape_cast %68 : vector<8xf32> to vector<8x1xf32>
    %70 = vector.broadcast %69 : vector<8x1xf32> to vector<8x8xf32>
    %71 = arith.subf %67, %70 : vector<8x8xf32>
    %72 = math.exp %71 : vector<8x8xf32>
    %cst_39 = arith.constant dense<0.000000e+00> : vector<8xf32>
    %73 = vector.multi_reduction <add>, %72, %cst_39 [1] : vector<8x8xf32> to vector<8xf32>
    %74 = vector.shape_cast %73 : vector<8xf32> to vector<8x1xf32>
    %75 = tpu.reciprocal %74 {approx = true} : vector<8x1xf32> -> vector<8x1xf32>
    %76 = vector.broadcast %75 : vector<8x1xf32> to vector<8x8xf32>
    %77 = arith.mulf %72, %76 : vector<8x8xf32>
    %78 = arith.truncf %77 : vector<8x8xf32> to vector<8x8xbf16>
    %cst_40 = arith.constant dense<0.000000e+00> : vector<8x8xf32>
    %79 = tpu.matmul %78, %62, %cst_40 {dimension_numbers = #tpu.dot_dimension_numbers<[1], [0], [0], [1], [0, 0, 1, 1], [], []>} : vector<8x8xbf16>, vector<8x8xbf16>, vector<8x8xf32> -> vector<8x8xf32>
    %80 = vector.extract_strided_slice %34 {offsets = [0, 1], sizes = [1, 1], strides = [1, 1]} : vector<1x4xf32> to vector<1x1xf32>
    %81 = vector.broadcast %80 : vector<1x1xf32> to vector<8x8xf32>
    %82 = arith.mulf %79, %81 : vector<8x8xf32>
    %83 = arith.truncf %82 : vector<8x8xf32> to vector<8x8xbf16>
    %c0_41 = arith.constant 0 : index
    %c8 = arith.constant 8 : index
    %84 = vector.load %arg23[%c0_41, %c8] : memref<8x32xbf16, #tpu.memory_space<vmem>>, vector<8x8xbf16>
    tpu.vector_store %arg23[%c0_41, %c8], %83 {strides = array<i32>} : memref<8x32xbf16, #tpu.memory_space<vmem>>, vector<8x8xbf16>,
    %85 = vector.extract_strided_slice %26 {offsets = [0, 16], sizes = [8, 8], strides = [1, 1]} : vector<8x32xbf16> to vector<8x8xbf16>
    %86 = vector.extract_strided_slice %27 {offsets = [0, 16], sizes = [8, 8], strides = [1, 1]} : vector<8x32xbf16> to vector<8x8xbf16>
    %87 = vector.extract_strided_slice %28 {offsets = [0, 16], sizes = [8, 8], strides = [1, 1]} : vector<8x32xbf16> to vector<8x8xbf16>
    %cst_42 = arith.constant dense<0.000000e+00> : vector<8x8xf32>
    %88 = tpu.matmul %85, %86, %cst_42 {dimension_numbers = #tpu.dot_dimension_numbers<[1], [1], [0], [0], [0, 0, 1, 0], [], []>} : vector<8x8xbf16>, vector<8x8xbf16>, vector<8x8xf32> -> vector<8x8xf32>
    %cst_43 = arith.constant -3.40282347E+38 : f32
    %89 = vector.shape_cast %32 : vector<1x8xi1> to vector<1x8xi1>
    %90 = vector.broadcast %89 : vector<1x8xi1> to vector<8x8xi1>
    %91 = vector.broadcast %cst_43 : f32 to vector<8x8xf32>
    %92 = arith.select %90, %91, %88 : vector<8x8xi1>, vector<8x8xf32>
    %cst_44 = arith.constant dense<0xFF800000> : vector<8xf32>
    %93 = vector.multi_reduction <maximumf>, %92, %cst_44 [1] : vector<8x8xf32> to vector<8xf32>
    %94 = vector.shape_cast %93 : vector<8xf32> to vector<8x1xf32>
    %95 = vector.broadcast %94 : vector<8x1xf32> to vector<8x8xf32>
    %96 = arith.subf %92, %95 : vector<8x8xf32>
    %97 = math.exp %96 : vector<8x8xf32>
    %cst_45 = arith.constant dense<0.000000e+00> : vector<8xf32>
    %98 = vector.multi_reduction <add>, %97, %cst_45 [1] : vector<8x8xf32> to vector<8xf32>
    %99 = vector.shape_cast %98 : vector<8xf32> to vector<8x1xf32>
    %100 = tpu.reciprocal %99 {approx = true} : vector<8x1xf32> -> vector<8x1xf32>
    %101 = vector.broadcast %100 : vector<8x1xf32> to vector<8x8xf32>
    %102 = arith.mulf %97, %101 : vector<8x8xf32>
    %103 = arith.truncf %102 : vector<8x8xf32> to vector<8x8xbf16>
    %cst_46 = arith.constant dense<0.000000e+00> : vector<8x8xf32>
    %104 = tpu.matmul %103, %87, %cst_46 {dimension_numbers = #tpu.dot_dimension_numbers<[1], [0], [0], [1], [0, 0, 1, 1], [], []>} : vector<8x8xbf16>, vector<8x8xbf16>, vector<8x8xf32> -> vector<8x8xf32>
    %105 = vector.extract_strided_slice %34 {offsets = [0, 2], sizes = [1, 1], strides = [1, 1]} : vector<1x4xf32> to vector<1x1xf32>
    %106 = vector.broadcast %105 : vector<1x1xf32> to vector<8x8xf32>
    %107 = arith.mulf %104, %106 : vector<8x8xf32>
    %108 = arith.truncf %107 : vector<8x8xf32> to vector<8x8xbf16>
    %c0_47 = arith.constant 0 : index
    %c16 = arith.constant 16 : index
    %109 = vector.load %arg23[%c0_47, %c16] : memref<8x32xbf16, #tpu.memory_space<vmem>>, vector<8x8xbf16>
    tpu.vector_store %arg23[%c0_47, %c16], %108 {strides = array<i32>} : memref<8x32xbf16, #tpu.memory_space<vmem>>, vector<8x8xbf16>,
    %110 = vector.extract_strided_slice %26 {offsets = [0, 24], sizes = [8, 8], strides = [1, 1]} : vector<8x32xbf16> to vector<8x8xbf16>
    %111 = vector.extract_strided_slice %27 {offsets = [0, 24], sizes = [8, 8], strides = [1, 1]} : vector<8x32xbf16> to vector<8x8xbf16>
    %112 = vector.extract_strided_slice %28 {offsets = [0, 24], sizes = [8, 8], strides = [1, 1]} : vector<8x32xbf16> to vector<8x8xbf16>
    %cst_48 = arith.constant dense<0.000000e+00> : vector<8x8xf32>
    %113 = tpu.matmul %110, %111, %cst_48 {dimension_numbers = #tpu.dot_dimension_numbers<[1], [1], [0], [0], [0, 0, 1, 0], [], []>} : vector<8x8xbf16>, vector<8x8xbf16>, vector<8x8xf32> -> vector<8x8xf32>
    %cst_49 = arith.constant -3.40282347E+38 : f32
    %114 = vector.shape_cast %32 : vector<1x8xi1> to vector<1x8xi1>
    %115 = vector.broadcast %114 : vector<1x8xi1> to vector<8x8xi1>
    %116 = vector.broadcast %cst_49 : f32 to vector<8x8xf32>
    %117 = arith.select %115, %116, %113 : vector<8x8xi1>, vector<8x8xf32>
    %cst_50 = arith.constant dense<0xFF800000> : vector<8xf32>
    %118 = vector.multi_reduction <maximumf>, %117, %cst_50 [1] : vector<8x8xf32> to vector<8xf32>
    %119 = vector.shape_cast %118 : vector<8xf32> to vector<8x1xf32>
    %120 = vector.broadcast %119 : vector<8x1xf32> to vector<8x8xf32>
    %121 = arith.subf %117, %120 : vector<8x8xf32>
    %122 = math.exp %121 : vector<8x8xf32>
    %cst_51 = arith.constant dense<0.000000e+00> : vector<8xf32>
    %123 = vector.multi_reduction <add>, %122, %cst_51 [1] : vector<8x8xf32> to vector<8xf32>
    %124 = vector.shape_cast %123 : vector<8xf32> to vector<8x1xf32>
    %125 = tpu.reciprocal %124 {approx = true} : vector<8x1xf32> -> vector<8x1xf32>
    %126 = vector.broadcast %125 : vector<8x1xf32> to vector<8x8xf32>
    %127 = arith.mulf %122, %126 : vector<8x8xf32>
    %128 = arith.truncf %127 : vector<8x8xf32> to vector<8x8xbf16>
    %cst_52 = arith.constant dense<0.000000e+00> : vector<8x8xf32>
    %129 = tpu.matmul %128, %112, %cst_52 {dimension_numbers = #tpu.dot_dimension_numbers<[1], [0], [0], [1], [0, 0, 1, 1], [], []>} : vector<8x8xbf16>, vector<8x8xbf16>, vector<8x8xf32> -> vector<8x8xf32>
    %130 = vector.extract_strided_slice %34 {offsets = [0, 3], sizes = [1, 1], strides = [1, 1]} : vector<1x4xf32> to vector<1x1xf32>
    %131 = vector.broadcast %130 : vector<1x1xf32> to vector<8x8xf32>
    %132 = arith.mulf %129, %131 : vector<8x8xf32>
    %133 = arith.truncf %132 : vector<8x8xf32> to vector<8x8xbf16>
    %c0_53 = arith.constant 0 : index
    %c24 = arith.constant 24 : index
    %134 = vector.load %arg23[%c0_53, %c24] : memref<8x32xbf16, #tpu.memory_space<vmem>>, vector<8x8xbf16>
    tpu.vector_store %arg23[%c0_53, %c24], %133 {strides = array<i32>} : memref<8x32xbf16, #tpu.memory_space<vmem>>, vector<8x8xbf16>,
    %c0_54 = arith.constant 0 : index
    %c0_55 = arith.constant 0 : index
    %135 = vector.load %arg23[%c0_54, %c0_55] : memref<8x32xbf16, #tpu.memory_space<vmem>>, vector<8x32xbf16>
    %c0_56 = arith.constant 0 : index
    %c0_57 = arith.constant 0 : index
    %c0_58 = arith.constant 0 : index
    %136 = vector.load %arg11[%c0_56, %c0_57, %c0_58] : memref<1x32x32xbf16, #tpu.memory_space<vmem>>, vector<1x32x32xbf16>
    %137 = vector.shape_cast %136 : vector<1x32x32xbf16> to vector<32x32xbf16>
    %cst_59 = arith.constant dense<0.000000e+00> : vector<8x32xf32>
    %138 = tpu.matmul %135, %137, %cst_59 {dimension_numbers = #tpu.dot_dimension_numbers<[1], [0], [0], [1], [0, 0, 1, 1], [], []>} : vector<8x32xbf16>, vector<32x32xbf16>, vector<8x32xf32> -> vector<8x32xf32>
    %c0_60 = arith.constant 0 : index
    %c0_61 = arith.constant 0 : index
    %c0_62 = arith.constant 0 : index
    %139 = vector.load %arg12[%c0_60, %c0_61, %c0_62] : memref<1x1x32xf32, #tpu.memory_space<vmem>>, vector<1x1x32xf32>
    %140 = vector.shape_cast %139 : vector<1x1x32xf32> to vector<1x32xf32>
    %141 = vector.broadcast %140 : vector<1x32xf32> to vector<8x32xf32>
    %142 = arith.addf %138, %141 : vector<8x32xf32>
    %143 = arith.addf %142, %3 : vector<8x32xf32>
    %c0_63 = arith.constant 0 : index
    %c0_64 = arith.constant 0 : index
    %c0_65 = arith.constant 0 : index
    %144 = vector.load %arg13[%c0_63, %c0_64, %c0_65] : memref<1x1x32xf32, #tpu.memory_space<vmem>>, vector<1x1x32xf32>
    %145 = vector.shape_cast %144 : vector<1x1x32xf32> to vector<1x32xf32>
    %c0_66 = arith.constant 0 : index
    %c0_67 = arith.constant 0 : index
    %c0_68 = arith.constant 0 : index
    %146 = vector.load %arg14[%c0_66, %c0_67, %c0_68] : memref<1x1x32xf32, #tpu.memory_space<vmem>>, vector<1x1x32xf32>
    %147 = vector.shape_cast %146 : vector<1x1x32xf32> to vector<1x32xf32>
    %cst_69 = arith.constant dense<0.000000e+00> : vector<8xf32>
    %148 = vector.multi_reduction <add>, %143, %cst_69 [1] : vector<8x32xf32> to vector<8xf32>
    %149 = vector.shape_cast %148 : vector<8xf32> to vector<8x1xf32>
    %cst_70 = arith.constant 3.200000e+01 : f32
    %150 = vector.broadcast %cst_70 : f32 to vector<8x1xf32>
    %151 = arith.divf %149, %150 : vector<8x1xf32>
    %152 = vector.broadcast %151 : vector<8x1xf32> to vector<8x32xf32>
    %153 = arith.subf %143, %152 : vector<8x32xf32>
    %154 = arith.mulf %153, %153 : vector<8x32xf32>
    %cst_71 = arith.constant dense<0.000000e+00> : vector<8xf32>
    %155 = vector.multi_reduction <add>, %154, %cst_71 [1] : vector<8x32xf32> to vector<8xf32>
    %156 = vector.shape_cast %155 : vector<8xf32> to vector<8x1xf32>
    %cst_72 = arith.constant 3.200000e+01 : f32
    %157 = vector.broadcast %cst_72 : f32 to vector<8x1xf32>
    %158 = arith.divf %156, %157 : vector<8x1xf32>
    %159 = vector.broadcast %151 : vector<8x1xf32> to vector<8x32xf32>
    %160 = arith.subf %143, %159 : vector<8x32xf32>
    %cst_73 = arith.constant 9.99999996E-13 : f32
    %161 = vector.broadcast %cst_73 : f32 to vector<8x1xf32>
    %162 = arith.addf %158, %161 : vector<8x1xf32>
    %163 = math.rsqrt %162 : vector<8x1xf32>
    %164 = vector.broadcast %163 : vector<8x1xf32> to vector<8x32xf32>
    %165 = arith.mulf %160, %164 : vector<8x32xf32>
    %166 = vector.broadcast %145 : vector<1x32xf32> to vector<8x32xf32>
    %167 = arith.mulf %165, %166 : vector<8x32xf32>
    %168 = vector.broadcast %147 : vector<1x32xf32> to vector<8x32xf32>
    %169 = arith.addf %167, %168 : vector<8x32xf32>
    %170 = arith.truncf %169 : vector<8x32xf32> to vector<8x32xbf16>
    %c0_74 = arith.constant 0 : index
    %c0_75 = arith.constant 0 : index
    %c0_76 = arith.constant 0 : index
    %171 = vector.load %arg15[%c0_74, %c0_75, %c0_76] : memref<1x32x64xbf16, #tpu.memory_space<vmem>>, vector<1x32x64xbf16>
    %172 = vector.shape_cast %171 : vector<1x32x64xbf16> to vector<32x64xbf16>
    %cst_77 = arith.constant dense<0.000000e+00> : vector<8x64xf32>
    %173 = tpu.matmul %170, %172, %cst_77 {dimension_numbers = #tpu.dot_dimension_numbers<[1], [0], [0], [1], [0, 0, 1, 1], [], []>} : vector<8x32xbf16>, vector<32x64xbf16>, vector<8x64xf32> -> vector<8x64xf32>
    %c0_78 = arith.constant 0 : index
    %c0_79 = arith.constant 0 : index
    %c0_80 = arith.constant 0 : index
    %174 = vector.load %arg16[%c0_78, %c0_79, %c0_80] : memref<1x1x64xf32, #tpu.memory_space<vmem>>, vector<1x1x64xf32>
    %175 = vector.shape_cast %174 : vector<1x1x64xf32> to vector<1x64xf32>
    %176 = vector.broadcast %175 : vector<1x64xf32> to vector<8x64xf32>
    %177 = arith.addf %173, %176 : vector<8x64xf32>
    %cst_81 = arith.constant 5.000000e-01 : f32
    %178 = vector.broadcast %cst_81 : f32 to vector<8x64xf32>
    %179 = arith.mulf %178, %177 : vector<8x64xf32>
    %cst_82 = arith.constant 0.707106769 : f32
    %180 = vector.broadcast %cst_82 : f32 to vector<8x64xf32>
    %181 = arith.mulf %177, %180 : vector<8x64xf32>
    %182 = math.erf %181 : vector<8x64xf32>
    %cst_83 = arith.constant 1.000000e+00 : f32
    %183 = vector.broadcast %cst_83 : f32 to vector<8x64xf32>
    %184 = arith.addf %183, %182 : vector<8x64xf32>
    %185 = arith.mulf %179, %184 : vector<8x64xf32>
    %186 = arith.truncf %185 : vector<8x64xf32> to vector<8x64xbf16>
    %c0_84 = arith.constant 0 : index
    %c0_85 = arith.constant 0 : index
    %c0_86 = arith.constant 0 : index
    %187 = vector.load %arg17[%c0_84, %c0_85, %c0_86] : memref<1x64x32xbf16, #tpu.memory_space<vmem>>, vector<1x64x32xbf16>
    %188 = vector.shape_cast %187 : vector<1x64x32xbf16> to vector<64x32xbf16>
    %cst_87 = arith.constant dense<0.000000e+00> : vector<8x32xf32>
    %189 = tpu.matmul %186, %188, %cst_87 {dimension_numbers = #tpu.dot_dimension_numbers<[1], [0], [0], [1], [0, 0, 1, 1], [], []>} : vector<8x64xbf16>, vector<64x32xbf16>, vector<8x32xf32> -> vector<8x32xf32>
    %c0_88 = arith.constant 0 : index
    %c0_89 = arith.constant 0 : index
    %c0_90 = arith.constant 0 : index
    %190 = vector.load %arg18[%c0_88, %c0_89, %c0_90] : memref<1x1x32xf32, #tpu.memory_space<vmem>>, vector<1x1x32xf32>
    %191 = vector.shape_cast %190 : vector<1x1x32xf32> to vector<1x32xf32>
    %192 = vector.broadcast %191 : vector<1x32xf32> to vector<8x32xf32>
    %193 = arith.addf %189, %192 : vector<8x32xf32>
    %194 = arith.addf %193, %169 : vector<8x32xf32>
    %c0_91 = arith.constant 0 : index
    %c0_92 = arith.constant 0 : index
    %c0_93 = arith.constant 0 : index
    %195 = vector.load %arg19[%c0_91, %c0_92, %c0_93] : memref<1x1x32xf32, #tpu.memory_space<vmem>>, vector<1x1x32xf32>
    %196 = vector.shape_cast %195 : vector<1x1x32xf32> to vector<1x32xf32>
    %c0_94 = arith.constant 0 : index
    %c0_95 = arith.constant 0 : index
    %c0_96 = arith.constant 0 : index
    %197 = vector.load %arg20[%c0_94, %c0_95, %c0_96] : memref<1x1x32xf32, #tpu.memory_space<vmem>>, vector<1x1x32xf32>
    %198 = vector.shape_cast %197 : vector<1x1x32xf32> to vector<1x32xf32>
    %cst_97 = arith.constant dense<0.000000e+00> : vector<8xf32>
    %199 = vector.multi_reduction <add>, %194, %cst_97 [1] : vector<8x32xf32> to vector<8xf32>
    %200 = vector.shape_cast %199 : vector<8xf32> to vector<8x1xf32>
    %cst_98 = arith.constant 3.200000e+01 : f32
    %201 = vector.broadcast %cst_98 : f32 to vector<8x1xf32>
    %202 = arith.divf %200, %201 : vector<8x1xf32>
    %203 = vector.broadcast %202 : vector<8x1xf32> to vector<8x32xf32>
    %204 = arith.subf %194, %203 : vector<8x32xf32>
    %205 = arith.mulf %204, %204 : vector<8x32xf32>
    %cst_99 = arith.constant dense<0.000000e+00> : vector<8xf32>
    %206 = vector.multi_reduction <add>, %205, %cst_99 [1] : vector<8x32xf32> to vector<8xf32>
    %207 = vector.shape_cast %206 : vector<8xf32> to vector<8x1xf32>
    %cst_100 = arith.constant 3.200000e+01 : f32
    %208 = vector.broadcast %cst_100 : f32 to vector<8x1xf32>
    %209 = arith.divf %207, %208 : vector<8x1xf32>
    %210 = vector.broadcast %202 : vector<8x1xf32> to vector<8x32xf32>
    %211 = arith.subf %194, %210 : vector<8x32xf32>
    %cst_101 = arith.constant 9.99999996E-13 : f32
    %212 = vector.broadcast %cst_101 : f32 to vector<8x1xf32>
    %213 = arith.addf %209, %212 : vector<8x1xf32>
    %214 = math.rsqrt %213 : vector<8x1xf32>
    %215 = vector.broadcast %214 : vector<8x1xf32> to vector<8x32xf32>
    %216 = arith.mulf %211, %215 : vector<8x32xf32>
    %217 = vector.broadcast %196 : vector<1x32xf32> to vector<8x32xf32>
    %218 = arith.mulf %216, %217 : vector<8x32xf32>
    %219 = vector.broadcast %198 : vector<1x32xf32> to vector<8x32xf32>
    %220 = arith.addf %218, %219 : vector<8x32xf32>
    %c0_102 = arith.constant 0 : index
    %c0_103 = arith.constant 0 : index
    %221 = vector.load %arg22[%c0_102, %c0_103] : memref<8x32xf32, #tpu.memory_space<vmem>>, vector<8x32xf32>
    tpu.vector_store %arg22[%c0_102, %c0_103], %220 {strides = array<i32>} : memref<8x32xf32, #tpu.memory_space<vmem>>, vector<8x32xf32>,
    %c1_i32 = arith.constant 1 : i32
    %222 = arith.cmpi eq, %arg1, %c1_i32 : i32
    %223 = arith.extui %222 : i1 to i32
    %c0_i32_104 = arith.constant 0 : i32
    %224 = arith.cmpi ne, %223, %c0_i32_104 : i32
    scf.if %224 {
      %c0_105 = arith.constant 0 : index
      %c0_106 = arith.constant 0 : index
      %c0_107 = arith.constant 0 : index
      %225 = vector.load %arg21[%c0_105, %c0_106, %c0_107] : memref<1x8x32xf32, #tpu.memory_space<vmem>>, vector<1x8x32xf32>
      %226 = vector.shape_cast %225 : vector<1x8x32xf32> to vector<8x32xf32>
      %227 = vector.shape_cast %220 : vector<8x32xf32> to vector<1x8x32xf32>
      tpu.vector_store %arg21[%c0_105, %c0_106, %c0_107], %227 {strides = array<i32>} : memref<1x8x32xf32, #tpu.memory_space<vmem>>, vector<1x8x32xf32>,
    } else {
    }
    return
  }
  func.func @transform_0(%arg0: i32, %arg1: i32) -> (i32, i32, i32) {
    %c0_i32 = arith.constant 0 : i32
    %c0_i32_0 = arith.constant 0 : i32
    %c0_i32_1 = arith.constant 0 : i32
    return %arg0, %c0_i32, %c0_i32_0 : i32, i32, i32
  }
  func.func @transform_1(%arg0: i32, %arg1: i32) -> (i32, i32, i32) {
    %c0_i32 = arith.constant 0 : i32
    %c0_i32_0 = arith.constant 0 : i32
    %c0_i32_1 = arith.constant 0 : i32
    return %arg0, %c0_i32, %c0_i32_0 : i32, i32, i32
  }
  func.func @transform_2(%arg0: i32, %arg1: i32) -> (i32, i32, i32) {
    %c0_i32 = arith.constant 0 : i32
    %c0_i32_0 = arith.constant 0 : i32
    %c0_i32_1 = arith.constant 0 : i32
    return %arg1, %c0_i32, %c0_i32_0 : i32, i32, i32
  }
  func.func @transform_3(%arg0: i32, %arg1: i32) -> (i32, i32, i32) {
    %c0_i32 = arith.constant 0 : i32
    %c0_i32_0 = arith.constant 0 : i32
    %c0_i32_1 = arith.constant 0 : i32
    return %arg1, %c0_i32, %c0_i32_0 : i32, i32, i32
  }
  func.func @transform_4(%arg0: i32, %arg1: i32) -> (i32, i32, i32) {
    %c0_i32 = arith.constant 0 : i32
    %c0_i32_0 = arith.constant 0 : i32
    %c0_i32_1 = arith.constant 0 : i32
    return %arg1, %c0_i32, %c0_i32_0 : i32, i32, i32
  }
  func.func @transform_5(%arg0: i32, %arg1: i32) -> (i32, i32, i32) {
    %c0_i32 = arith.constant 0 : i32
    %c0_i32_0 = arith.constant 0 : i32
    %c0_i32_1 = arith.constant 0 : i32
    return %arg1, %c0_i32, %c0_i32_0 : i32, i32, i32
  }
  func.func @transform_6(%arg0: i32, %arg1: i32) -> (i32, i32, i32) {
    %c0_i32 = arith.constant 0 : i32
    %c0_i32_0 = arith.constant 0 : i32
    %c0_i32_1 = arith.constant 0 : i32
    return %arg1, %c0_i32, %c0_i32_0 : i32, i32, i32
  }
  func.func @transform_7(%arg0: i32, %arg1: i32) -> (i32, i32, i32) {
    %c0_i32 = arith.constant 0 : i32
    %c0_i32_0 = arith.constant 0 : i32
    %c0_i32_1 = arith.constant 0 : i32
    return %arg1, %c0_i32, %c0_i32_0 : i32, i32, i32
  }
  func.func @transform_8(%arg0: i32, %arg1: i32) -> (i32, i32, i32) {
    %c0_i32 = arith.constant 0 : i32
    %c0_i32_0 = arith.constant 0 : i32
    %c0_i32_1 = arith.constant 0 : i32
    return %arg1, %c0_i32, %c0_i32_0 : i32, i32, i32
  }
  func.func @transform_9(%arg0: i32, %arg1: i32) -> (i32, i32, i32) {
    %c0_i32 = arith.constant 0 : i32
    %c0_i32_0 = arith.constant 0 : i32
    %c0_i32_1 = arith.constant 0 : i32
    return %arg1, %c0_i32, %c0_i32_0 : i32, i32, i32
  }
  func.func @transform_10(%arg0: i32, %arg1: i32) -> (i32, i32, i32) {
    %c0_i32 = arith.constant 0 : i32
    %c0_i32_0 = arith.constant 0 : i32
    %c0_i32_1 = arith.constant 0 : i32
    return %arg1, %c0_i32, %c0_i32_0 : i32, i32, i32
  }
  func.func @transform_11(%arg0: i32, %arg1: i32) -> (i32, i32, i32) {
    %c0_i32 = arith.constant 0 : i32
    %c0_i32_0 = arith.constant 0 : i32
    %c0_i32_1 = arith.constant 0 : i32
    return %arg1, %c0_i32, %c0_i32_0 : i32, i32, i32
  }
  func.func @transform_12(%arg0: i32, %arg1: i32) -> (i32, i32, i32) {
    %c0_i32 = arith.constant 0 : i32
    %c0_i32_0 = arith.constant 0 : i32
    %c0_i32_1 = arith.constant 0 : i32
    return %arg1, %c0_i32, %c0_i32_0 : i32, i32, i32
  }
  func.func @transform_13(%arg0: i32, %arg1: i32) -> (i32, i32, i32) {
    %c0_i32 = arith.constant 0 : i32
    %c0_i32_0 = arith.constant 0 : i32
    %c0_i32_1 = arith.constant 0 : i32
    return %arg1, %c0_i32, %c0_i32_0 : i32, i32, i32
  }
  func.func @transform_14(%arg0: i32, %arg1: i32) -> (i32, i32, i32) {
    %c0_i32 = arith.constant 0 : i32
    %c0_i32_0 = arith.constant 0 : i32
    %c0_i32_1 = arith.constant 0 : i32
    return %arg1, %c0_i32, %c0_i32_0 : i32, i32, i32
  }
  func.func @transform_15(%arg0: i32, %arg1: i32) -> (i32, i32, i32) {
    %c0_i32 = arith.constant 0 : i32
    %c0_i32_0 = arith.constant 0 : i32
    %c0_i32_1 = arith.constant 0 : i32
    return %arg1, %c0_i32, %c0_i32_0 : i32, i32, i32
  }
  func.func @transform_16(%arg0: i32, %arg1: i32) -> (i32, i32, i32) {
    %c0_i32 = arith.constant 0 : i32
    %c0_i32_0 = arith.constant 0 : i32
    %c0_i32_1 = arith.constant 0 : i32
    return %arg1, %c0_i32, %c0_i32_0 : i32, i32, i32
  }
  func.func @transform_17(%arg0: i32, %arg1: i32) -> (i32, i32, i32) {
    %c0_i32 = arith.constant 0 : i32
    %c0_i32_0 = arith.constant 0 : i32
    %c0_i32_1 = arith.constant 0 : i32
    return %arg1, %c0_i32, %c0_i32_0 : i32, i32, i32
  }
  func.func @transform_18(%arg0: i32, %arg1: i32) -> (i32, i32, i32) {
    %c0_i32 = arith.constant 0 : i32
    %c0_i32_0 = arith.constant 0 : i32
    %c0_i32_1 = arith.constant 0 : i32
    return %arg1, %c0_i32, %c0_i32_0 : i32, i32, i32
  }
  func.func @transform_19(%arg0: i32, %arg1: i32) -> (i32, i32, i32) {
    %c0_i32 = arith.constant 0 : i32
    %c0_i32_0 = arith.constant 0 : i32
    %c0_i32_1 = arith.constant 0 : i32
    return %arg0, %c0_i32, %c0_i32_0 : i32, i32, i32
  }
}

</mosaic_0001>

<llo_original>
// kernel: tpu_custom_call.1
$region0: #{tpu_custom_call.1}
  #allocation0 [shape = 'u32[]', space=smem, size = 0x4, offset = 0x4, fixed_abs, tag = 'smem constant byte address 0x4 - core index']
  #allocation1 [shape = 'u32[72,128]{1,0:T(1,128)}', space=vmem, size = 0x9000, scoped, tag = 'internal scratch']
  #allocation2 [shape = 'f32[8,32]{1,0:T(8,128)}', space=vmem, size = 0x1000, scoped, tag = 'scratch operand']
  #allocation3 [shape = 'bf16[8,32]{1,0:T(8,128)(2,1)}', space=vmem, size = 0x800, scoped, tag = 'scratch operand']
  %s0 = inlined_call_operand.hbm [shape: f32[2,8,32], index: 0, kind: input, shape index: {}]
  %s1 = inlined_call_operand.hbm [shape: f32[2,1,8], index: 1, kind: input, shape index: {}]
  %s2 = inlined_call_operand.hbm [shape: f32[2,1,4], index: 2, kind: input, shape index: {}]
  %s3 = inlined_call_operand.vmem [shape: bf16[2,32,32], index: 3, kind: input, shape index: {}]
  %s4 = inlined_call_operand.vmem [shape: f32[2,1,32], index: 4, kind: input, shape index: {}]
  %s5 = inlined_call_operand.vmem [shape: bf16[2,32,32], index: 5, kind: input, shape index: {}]
  %s6 = inlined_call_operand.vmem [shape: f32[2,1,32], index: 6, kind: input, shape index: {}]
  %s7 = inlined_call_operand.vmem [shape: bf16[2,32,32], index: 7, kind: input, shape index: {}]
  %s8 = inlined_call_operand.vmem [shape: f32[2,1,32], index: 8, kind: input, shape index: {}]
  %s9 = inlined_call_operand.hbm [shape: bf16[2,32,32], index: 9, kind: input, shape index: {}]
  %s10 = inlined_call_operand.vmem [shape: f32[2,1,32], index: 10, kind: input, shape index: {}]
  %s11 = inlined_call_operand.hbm [shape: f32[2,1,32], index: 11, kind: input, shape index: {}]
  %s12 = inlined_call_operand.vmem [shape: f32[2,1,32], index: 12, kind: input, shape index: {}]
  %s13 = inlined_call_operand.hbm [shape: bf16[2,32,64], index: 13, kind: input, shape index: {}]
  %s14 = inlined_call_operand.vmem [shape: f32[2,1,64], index: 14, kind: input, shape index: {}]
  %s15 = inlined_call_operand.vmem [shape: bf16[2,64,32], index: 15, kind: input, shape index: {}]
  %s16 = inlined_call_operand.vmem [shape: f32[2,1,32], index: 16, kind: input, shape index: {}]
  %s17 = inlined_call_operand.hbm [shape: f32[2,1,32], index: 17, kind: input, shape index: {}]
  %s18 = inlined_call_operand.vmem [shape: f32[2,1,32], index: 18, kind: input, shape index: {}]
  %s19 = inlined_call_operand.hbm [shape: f32[2,8,32], index: 19, kind: output, shape index: {}]
  %s20 = sld [smem:[#allocation0]]
  $region145: #{tpu_custom_call.1} parent=0
    _
  %s22 = ssub.s32 1, %s20
  %s23 = scalar_select 0, %s22, %s20
  $region1: #{tpu_custom_call.1} parent=0
    #allocation4 [shape = 'u8[8192]{0}', space=vmem, size = 0x2000, scoped, tag = 'input window, operand 0']
    #allocation5 [shape = 's32[2]{0}', space=sflag, size = 0x8, scoped, tag = 'scoped memory for tpu_custom_call.1']
    #allocation6 [shape = 's32[2]{0}', space=sflag, size = 0x8, scoped, tag = 'scoped memory for tpu_custom_call.1']
    #allocation7 [shape = 'u8[1024]{0}', space=vmem, size = 0x400, scoped, tag = 'input window, operand 1']
    #allocation8 [shape = 's32[2]{0}', space=sflag, size = 0x8, scoped, tag = 'scoped memory for tpu_custom_call.1']
    #allocation9 [shape = 'u8[1024]{0}', space=vmem, size = 0x400, scoped, tag = 'input window, operand 2']
    #allocation10 [shape = 'u8[16384]{0}', space=vmem, size = 0x4000, scoped, tag = 'input window, operand 9']
    #allocation11 [shape = 's32[2]{0}', space=sflag, size = 0x8, scoped, tag = 'scoped memory for tpu_custom_call.1']
    #allocation12 [shape = 'u8[1024]{0}', space=vmem, size = 0x400, scoped, tag = 'input window, operand 11']
    #allocation13 [shape = 'u8[16384]{0}', space=vmem, size = 0x4000, scoped, tag = 'input window, operand 13']
    #allocation14 [shape = 's32[2]{0}', space=sflag, size = 0x8, scoped, tag = 'scoped memory for tpu_custom_call.1']
    #allocation15 [shape = 'u8[1024]{0}', space=vmem, size = 0x400, scoped, tag = 'input window, operand 17']
    #allocation16 [shape = 'u8[8192]{0}', space=vmem, size = 0x2000, scoped, tag = 'output window, operand 0']
    %24 = vsyncpa [#allocation5], 0
    %s25 = scalar_lea.sflag [#allocation5], 1
    %26 = vsyncpa %s25, 0
    %27 = vsyncpa [#allocation8], 0
    %s28 = scalar_lea.sflag [#allocation8], 1
    %29 = vsyncpa %s28, 0
    %30 = vsyncpa [#allocation11], 0
    %s31 = scalar_lea.sflag [#allocation11], 1
    %32 = vsyncpa %s31, 0
    %33 = vsyncpa [#allocation14], 0
    %s34 = scalar_lea.sflag [#allocation14], 1
    %35 = vsyncpa %s34, 0
    %36 = vsyncpa [#allocation6], 0
    %s37 = scalar_lea.sflag [#allocation6], 1
    %38 = vsyncpa %s37, 0
    loop: start=0, step=1, limit=6
    $region2: #{tpu_custom_call.1} parent=1 // loop_pre_header
      _
    $region3: #{tpu_custom_call.1} parent=1 // loop_header
      %s40 = sphi 0, %s44
      %p41 = scmp.ge.s32.totalorder %s40, 6
      %s47 = sphi 0, %s59
      %s48 = sphi 0, %s55
      %s49 = sphi 0, %s47
      %s50 = sphi 0, %s48
      %s51 = sphi 0, %s49
      %s52 = sphi 0, %s50
      %s62 = sphi 0, %s64
      %s65 = sphi 0, %s62
      %s66 = sphi 0, %s65
      %s82 = sphi 0, %s66
      %s88 = sphi 0, %s90
      %s91 = sphi 0, %s88
      %s92 = sphi 0, %s91
      %s108 = sphi 0, %s92
      %s114 = sphi 0, %s116
      %s117 = sphi 0, %s114
      %s118 = sphi 0, %s117
      %s134 = sphi 0, %s118
      %s140 = sphi 0, %s142
      %s143 = sphi 0, %s140
      %s144 = sphi 0, %s143
      %s160 = sphi 0, %s144
      %s166 = sphi 0, %s168
      %s169 = sphi 0, %s166
      %s170 = sphi 0, %s169
      %s186 = sphi 0, %s170
      %s192 = sphi 0, %s194
      %s195 = sphi 0, %s192
      %s196 = sphi 0, %s195
      %s212 = sphi 0, %s196
      %s218 = sphi 0, %s220
      %s221 = sphi 0, %s218
      %s222 = sphi 0, %s221
      %s238 = sphi 0, %s222
      %s244 = sphi 0, %s246
      %s247 = sphi 0, %s244
      %s248 = sphi 0, %s247
      %s264 = sphi 0, %s248
      %s270 = sphi 0, %s272
      %s273 = sphi 0, %s270
      %s274 = sphi 0, %s273
      %s290 = sphi 0, %s274
      %s296 = sphi 0, %s298
      %s299 = sphi 0, %s296
      %s300 = sphi 0, %s299
      %s316 = sphi 0, %s300
      %s322 = sphi 0, %s324
      %s325 = sphi 0, %s322
      %s326 = sphi 0, %s325
      %s342 = sphi 0, %s326
      %s348 = sphi 0, %s350
      %s351 = sphi 0, %s348
      %s352 = sphi 0, %s351
      %s368 = sphi 0, %s352
      %s374 = sphi 0, %s376
      %s377 = sphi 0, %s374
      %s378 = sphi 0, %s377
      %s394 = sphi 0, %s378
      %s400 = sphi 0, %s402
      %s403 = sphi 0, %s400
      %s404 = sphi 0, %s403
      %s420 = sphi 0, %s404
      %s426 = sphi 0, %s428
      %s429 = sphi 0, %s426
      %s430 = sphi 0, %s429
      %s446 = sphi 0, %s430
      %s452 = sphi 0, %s454
      %s455 = sphi 0, %s452
      %s456 = sphi 0, %s455
      %s472 = sphi 0, %s456
      %s478 = sphi 0, %s480
      %s481 = sphi 0, %s478
      %s482 = sphi 0, %s481
      %s498 = sphi 0, %s482
      %s504 = sphi 0, %s506
      %s507 = sphi 0, %s504
      %s508 = sphi 0, %s507
      %s524 = sphi 0, %s508
      %s530 = sphi 0, %s532
      %s533 = sphi 0, %s530
      %s534 = sphi 0, %s533
      %s550 = sphi 0, %s534
      %s556 = sphi 0, %s558
      %s559 = sphi 0, %s556
      %s560 = sphi 0, %s559
      %s576 = sphi 0, %s560
    $region4: #{tpu_custom_call.1} parent=1 // loop_header_branch
      %43 = sbr.rel (%p41) target = $region8
    $region5: #{tpu_custom_call.1} parent=1 // loop_body
      %s45 = ssub.s32 %s40, 1
      %s46 = ssub.s32 %s40, 2
      %s53 = sadd.s32 1, %s48
      %p54 = scmp.ge.s32.totalorder %s53, 2
      %s55 = scalar_select %p54, 0, %s53
      %s56 = sadd.s32 1, %s47
      %s57 = scalar_select %p54, %s56, %s47
      %p58 = scmp.ge.s32.totalorder %s57, 2
      %s59 = scalar_select %p58, 0, %s57
      %s60 = ssub.s32 %s47, %s59
      %p61 = scmp.eq.s32.totalorder %s60, 0
      %s63 = sadd.s32 %s62, 1
      %s64 = scalar_select %p61, %s62, %s63
      %p67 = pneg %p61
      %p68 = scmp.eq.s32.totalorder %s40, 3
      %p69 = por %p67, %p68
      %p70 = scmp.ne.s32.totalorder %s62, %s65
      %p71 = scmp.eq.s32.totalorder %s40, 0
      %p72 = por %p70, %p71
      %p73 = scmp.ne.s32.totalorder %s62, %s65
      %p74 = scmp.eq.s32.totalorder %s45, 3
      %p75 = por %p73, %p74
      %p76 = scmp.ne.s32.totalorder %s65, %s66
      %p77 = scmp.eq.s32.totalorder %s45, 0
      %p78 = por %p76, %p77
      %p79 = scmp.ne.s32.totalorder %s65, %s66
      %p80 = scmp.eq.s32.totalorder %s46, 3
      %p81 = por %p79, %p80
      %p83 = scmp.ne.s32.totalorder %s66, %s82
      %p84 = scmp.eq.s32.totalorder %s46, 0
      %p85 = por %p83, %p84
      %s86 = ssub.s32 %s47, %s59
      %p87 = scmp.eq.s32.totalorder %s86, 0
      %s89 = sadd.s32 %s88, 1
      %s90 = scalar_select %p87, %s88, %s89
      %p93 = pneg %p87
      %p94 = scmp.eq.s32.totalorder %s40, 3
      %p95 = por %p93, %p94
      %p96 = scmp.ne.s32.totalorder %s88, %s91
      %p97 = scmp.eq.s32.totalorder %s40, 0
      %p98 = por %p96, %p97
      %p99 = scmp.ne.s32.totalorder %s88, %s91
      %p100 = scmp.eq.s32.totalorder %s45, 3
      %p101 = por %p99, %p100
      %p102 = scmp.ne.s32.totalorder %s91, %s92
      %p103 = scmp.eq.s32.totalorder %s45, 0
      %p104 = por %p102, %p103
      %p105 = scmp.ne.s32.totalorder %s91, %s92
      %p106 = scmp.eq.s32.totalorder %s46, 3
      %p107 = por %p105, %p106
      %p109 = scmp.ne.s32.totalorder %s92, %s108
      %p110 = scmp.eq.s32.totalorder %s46, 0
      %p111 = por %p109, %p110
      %s112 = ssub.s32 %s48, %s55
      %p113 = scmp.eq.s32.totalorder %s112, 0
      %s115 = sadd.s32 %s114, 1
      %s116 = scalar_select %p113, %s114, %s115
      %p119 = pneg %p113
      %p120 = scmp.eq.s32.totalorder %s40, 3
      %p121 = por %p119, %p120
      %p122 = scmp.ne.s32.totalorder %s114, %s117
      %p123 = scmp.eq.s32.totalorder %s40, 0
      %p124 = por %p122, %p123
      %p125 = scmp.ne.s32.totalorder %s114, %s117
      %p126 = scmp.eq.s32.totalorder %s45, 3
      %p127 = por %p125, %p126
      %p128 = scmp.ne.s32.totalorder %s117, %s118
      %p129 = scmp.eq.s32.totalorder %s45, 0
      %p130 = por %p128, %p129
      %p131 = scmp.ne.s32.totalorder %s117, %s118
      %p132 = scmp.eq.s32.totalorder %s46, 3
      %p133 = por %p131, %p132
      %p135 = scmp.ne.s32.totalorder %s118, %s134
      %p136 = scmp.eq.s32.totalorder %s46, 0
      %p137 = por %p135, %p136
      %s138 = ssub.s32 %s48, %s55
      %p139 = scmp.eq.s32.totalorder %s138, 0
      %s141 = sadd.s32 %s140, 1
      %s142 = scalar_select %p139, %s140, %s141
      %p145 = pneg %p139
      %p146 = scmp.eq.s32.totalorder %s40, 3
      %p147 = por %p145, %p146
      %p148 = scmp.ne.s32.totalorder %s140, %s143
      %p149 = scmp.eq.s32.totalorder %s40, 0
      %p150 = por %p148, %p149
      %p151 = scmp.ne.s32.totalorder %s140, %s143
      %p152 = scmp.eq.s32.totalorder %s45, 3
      %p153 = por %p151, %p152
      %p154 = scmp.ne.s32.totalorder %s143, %s144
      %p155 = scmp.eq.s32.totalorder %s45, 0
      %p156 = por %p154, %p155
      %p157 = scmp.ne.s32.totalorder %s143, %s144
      %p158 = scmp.eq.s32.totalorder %s46, 3
      %p159 = por %p157, %p158
      %p161 = scmp.ne.s32.totalorder %s144, %s160
      %p162 = scmp.eq.s32.totalorder %s46, 0
      %p163 = por %p161, %p162
      %s164 = ssub.s32 %s48, %s55
      %p165 = scmp.eq.s32.totalorder %s164, 0
      %s167 = sadd.s32 %s166, 1
      %s168 = scalar_select %p165, %s166, %s167
      %p171 = pneg %p165
      %p172 = scmp.eq.s32.totalorder %s40, 3
      %p173 = por %p171, %p172
      %p174 = scmp.ne.s32.totalorder %s166, %s169
      %p175 = scmp.eq.s32.totalorder %s40, 0
      %p176 = por %p174, %p175
      %p177 = scmp.ne.s32.totalorder %s166, %s169
      %p178 = scmp.eq.s32.totalorder %s45, 3
      %p179 = por %p177, %p178
      %p180 = scmp.ne.s32.totalorder %s169, %s170
      %p181 = scmp.eq.s32.totalorder %s45, 0
      %p182 = por %p180, %p181
      %p183 = scmp.ne.s32.totalorder %s169, %s170
      %p184 = scmp.eq.s32.totalorder %s46, 3
      %p185 = por %p183, %p184
      %p187 = scmp.ne.s32.totalorder %s170, %s186
      %p188 = scmp.eq.s32.totalorder %s46, 0
      %p189 = por %p187, %p188
      %s190 = ssub.s32 %s48, %s55
      %p191 = scmp.eq.s32.totalorder %s190, 0
      %s193 = sadd.s32 %s192, 1
      %s194 = scalar_select %p191, %s192, %s193
      %p197 = pneg %p191
      %p198 = scmp.eq.s32.totalorder %s40, 3
      %p199 = por %p197, %p198
      %p200 = scmp.ne.s32.totalorder %s192, %s195
      %p201 = scmp.eq.s32.totalorder %s40, 0
      %p202 = por %p200, %p201
      %p203 = scmp.ne.s32.totalorder %s192, %s195
      %p204 = scmp.eq.s32.totalorder %s45, 3
      %p205 = por %p203, %p204
      %p206 = scmp.ne.s32.totalorder %s195, %s196
      %p207 = scmp.eq.s32.totalorder %s45, 0
      %p208 = por %p206, %p207
      %p209 = scmp.ne.s32.totalorder %s195, %s196
      %p210 = scmp.eq.s32.totalorder %s46, 3
      %p211 = por %p209, %p210
      %p213 = scmp.ne.s32.totalorder %s196, %s212
      %p214 = scmp.eq.s32.totalorder %s46, 0
      %p215 = por %p213, %p214
      %s216 = ssub.s32 %s48, %s55
      %p217 = scmp.eq.s32.totalorder %s216, 0
      %s219 = sadd.s32 %s218, 1
      %s220 = scalar_select %p217, %s218, %s219
      %p223 = pneg %p217
      %p224 = scmp.eq.s32.totalorder %s40, 3
      %p225 = por %p223, %p224
      %p226 = scmp.ne.s32.totalorder %s218, %s221
      %p227 = scmp.eq.s32.totalorder %s40, 0
      %p228 = por %p226, %p227
      %p229 = scmp.ne.s32.totalorder %s218, %s221
      %p230 = scmp.eq.s32.totalorder %s45, 3
      %p231 = por %p229, %p230
      %p232 = scmp.ne.s32.totalorder %s221, %s222
      %p233 = scmp.eq.s32.totalorder %s45, 0
      %p234 = por %p232, %p233
      %p235 = scmp.ne.s32.totalorder %s221, %s222
      %p236 = scmp.eq.s32.totalorder %s46, 3
      %p237 = por %p235, %p236
      %p239 = scmp.ne.s32.totalorder %s222, %s238
      %p240 = scmp.eq.s32.totalorder %s46, 0
      %p241 = por %p239, %p240
      %s242 = ssub.s32 %s48, %s55
      %p243 = scmp.eq.s32.totalorder %s242, 0
      %s245 = sadd.s32 %s244, 1
      %s246 = scalar_select %p243, %s244, %s245
      %p249 = pneg %p243
      %p250 = scmp.eq.s32.totalorder %s40, 3
      %p251 = por %p249, %p250
      %p252 = scmp.ne.s32.totalorder %s244, %s247
      %p253 = scmp.eq.s32.totalorder %s40, 0
      %p254 = por %p252, %p253
      %p255 = scmp.ne.s32.totalorder %s244, %s247
      %p256 = scmp.eq.s32.totalorder %s45, 3
      %p257 = por %p255, %p256
      %p258 = scmp.ne.s32.totalorder %s247, %s248
      %p259 = scmp.eq.s32.totalorder %s45, 0
      %p260 = por %p258, %p259
      %p261 = scmp.ne.s32.totalorder %s247, %s248
      %p262 = scmp.eq.s32.totalorder %s46, 3
      %p263 = por %p261, %p262
      %p265 = scmp.ne.s32.totalorder %s248, %s264
      %p266 = scmp.eq.s32.totalorder %s46, 0
      %p267 = por %p265, %p266
      %s268 = ssub.s32 %s48, %s55
      %p269 = scmp.eq.s32.totalorder %s268, 0
      %s271 = sadd.s32 %s270, 1
      %s272 = scalar_select %p269, %s270, %s271
      %p275 = pneg %p269
      %p276 = scmp.eq.s32.totalorder %s40, 3
      %p277 = por %p275, %p276
      %p278 = scmp.ne.s32.totalorder %s270, %s273
      %p279 = scmp.eq.s32.totalorder %s40, 0
      %p280 = por %p278, %p279
      %p281 = scmp.ne.s32.totalorder %s270, %s273
      %p282 = scmp.eq.s32.totalorder %s45, 3
      %p283 = por %p281, %p282
      %p284 = scmp.ne.s32.totalorder %s273, %s274
      %p285 = scmp.eq.s32.totalorder %s45, 0
      %p286 = por %p284, %p285
      %p287 = scmp.ne.s32.totalorder %s273, %s274
      %p288 = scmp.eq.s32.totalorder %s46, 3
      %p289 = por %p287, %p288
      %p291 = scmp.ne.s32.totalorder %s274, %s290
      %p292 = scmp.eq.s32.totalorder %s46, 0
      %p293 = por %p291, %p292
      %s294 = ssub.s32 %s48, %s55
      %p295 = scmp.eq.s32.totalorder %s294, 0
      %s297 = sadd.s32 %s296, 1
      %s298 = scalar_select %p295, %s296, %s297
      %p301 = pneg %p295
      %p302 = scmp.eq.s32.totalorder %s40, 3
      %p303 = por %p301, %p302
      %p304 = scmp.ne.s32.totalorder %s296, %s299
      %p305 = scmp.eq.s32.totalorder %s40, 0
      %p306 = por %p304, %p305
      %p307 = scmp.ne.s32.totalorder %s296, %s299
      %p308 = scmp.eq.s32.totalorder %s45, 3
      %p309 = por %p307, %p308
      %p310 = scmp.ne.s32.totalorder %s299, %s300
      %p311 = scmp.eq.s32.totalorder %s45, 0
      %p312 = por %p310, %p311
      %p313 = scmp.ne.s32.totalorder %s299, %s300
      %p314 = scmp.eq.s32.totalorder %s46, 3
      %p315 = por %p313, %p314
      %p317 = scmp.ne.s32.totalorder %s300, %s316
      %p318 = scmp.eq.s32.totalorder %s46, 0
      %p319 = por %p317, %p318
      %s320 = ssub.s32 %s48, %s55
      %p321 = scmp.eq.s32.totalorder %s320, 0
      %s323 = sadd.s32 %s322, 1
      %s324 = scalar_select %p321, %s322, %s323
      %p327 = pneg %p321
      %p328 = scmp.eq.s32.totalorder %s40, 3
      %p329 = por %p327, %p328
      %p330 = scmp.ne.s32.totalorder %s322, %s325
      %p331 = scmp.eq.s32.totalorder %s40, 0
      %p332 = por %p330, %p331
      %p333 = scmp.ne.s32.totalorder %s322, %s325
      %p334 = scmp.eq.s32.totalorder %s45, 3
      %p335 = por %p333, %p334
      %p336 = scmp.ne.s32.totalorder %s325, %s326
      %p337 = scmp.eq.s32.totalorder %s45, 0
      %p338 = por %p336, %p337
      %p339 = scmp.ne.s32.totalorder %s325, %s326
      %p340 = scmp.eq.s32.totalorder %s46, 3
      %p341 = por %p339, %p340
      %p343 = scmp.ne.s32.totalorder %s326, %s342
      %p344 = scmp.eq.s32.totalorder %s46, 0
      %p345 = por %p343, %p344
      %s346 = ssub.s32 %s48, %s55
      %p347 = scmp.eq.s32.totalorder %s346, 0
      %s349 = sadd.s32 %s348, 1
      %s350 = scalar_select %p347, %s348, %s349
      %p353 = pneg %p347
      %p354 = scmp.eq.s32.totalorder %s40, 3
      %p355 = por %p353, %p354
      %p356 = scmp.ne.s32.totalorder %s348, %s351
      %p357 = scmp.eq.s32.totalorder %s40, 0
      %p358 = por %p356, %p357
      %p359 = scmp.ne.s32.totalorder %s348, %s351
      %p360 = scmp.eq.s32.totalorder %s45, 3
      %p361 = por %p359, %p360
      %p362 = scmp.ne.s32.totalorder %s351, %s352
      %p363 = scmp.eq.s32.totalorder %s45, 0
      %p364 = por %p362, %p363
      %p365 = scmp.ne.s32.totalorder %s351, %s352
      %p366 = scmp.eq.s32.totalorder %s46, 3
      %p367 = por %p365, %p366
      %p369 = scmp.ne.s32.totalorder %s352, %s368
      %p370 = scmp.eq.s32.totalorder %s46, 0
      %p371 = por %p369, %p370
      %s372 = ssub.s32 %s48, %s55
      %p373 = scmp.eq.s32.totalorder %s372, 0
      %s375 = sadd.s32 %s374, 1
      %s376 = scalar_select %p373, %s374, %s375
      %p379 = pneg %p373
      %p380 = scmp.eq.s32.totalorder %s40, 3
      %p381 = por %p379, %p380
      %p382 = scmp.ne.s32.totalorder %s374, %s377
      %p383 = scmp.eq.s32.totalorder %s40, 0
      %p384 = por %p382, %p383
      %p385 = scmp.ne.s32.totalorder %s374, %s377
      %p386 = scmp.eq.s32.totalorder %s45, 3
      %p387 = por %p385, %p386
      %p388 = scmp.ne.s32.totalorder %s377, %s378
      %p389 = scmp.eq.s32.totalorder %s45, 0
      %p390 = por %p388, %p389
      %p391 = scmp.ne.s32.totalorder %s377, %s378
      %p392 = scmp.eq.s32.totalorder %s46, 3
      %p393 = por %p391, %p392
      %p395 = scmp.ne.s32.totalorder %s378, %s394
      %p396 = scmp.eq.s32.totalorder %s46, 0
      %p397 = por %p395, %p396
      %s398 = ssub.s32 %s48, %s55
      %p399 = scmp.eq.s32.totalorder %s398, 0
      %s401 = sadd.s32 %s400, 1
      %s402 = scalar_select %p399, %s400, %s401
      %p405 = pneg %p399
      %p406 = scmp.eq.s32.totalorder %s40, 3
      %p407 = por %p405, %p406
      %p408 = scmp.ne.s32.totalorder %s400, %s403
      %p409 = scmp.eq.s32.totalorder %s40, 0
      %p410 = por %p408, %p409
      %p411 = scmp.ne.s32.totalorder %s400, %s403
      %p412 = scmp.eq.s32.totalorder %s45, 3
      %p413 = por %p411, %p412
      %p414 = scmp.ne.s32.totalorder %s403, %s404
      %p415 = scmp.eq.s32.totalorder %s45, 0
      %p416 = por %p414, %p415
      %p417 = scmp.ne.s32.totalorder %s403, %s404
      %p418 = scmp.eq.s32.totalorder %s46, 3
      %p419 = por %p417, %p418
      %p421 = scmp.ne.s32.totalorder %s404, %s420
      %p422 = scmp.eq.s32.totalorder %s46, 0
      %p423 = por %p421, %p422
      %s424 = ssub.s32 %s48, %s55
      %p425 = scmp.eq.s32.totalorder %s424, 0
      %s427 = sadd.s32 %s426, 1
      %s428 = scalar_select %p425, %s426, %s427
      %p431 = pneg %p425
      %p432 = scmp.eq.s32.totalorder %s40, 3
      %p433 = por %p431, %p432
      %p434 = scmp.ne.s32.totalorder %s426, %s429
      %p435 = scmp.eq.s32.totalorder %s40, 0
      %p436 = por %p434, %p435
      %p437 = scmp.ne.s32.totalorder %s426, %s429
      %p438 = scmp.eq.s32.totalorder %s45, 3
      %p439 = por %p437, %p438
      %p440 = scmp.ne.s32.totalorder %s429, %s430
      %p441 = scmp.eq.s32.totalorder %s45, 0
      %p442 = por %p440, %p441
      %p443 = scmp.ne.s32.totalorder %s429, %s430
      %p444 = scmp.eq.s32.totalorder %s46, 3
      %p445 = por %p443, %p444
      %p447 = scmp.ne.s32.totalorder %s430, %s446
      %p448 = scmp.eq.s32.totalorder %s46, 0
      %p449 = por %p447, %p448
      %s450 = ssub.s32 %s48, %s55
      %p451 = scmp.eq.s32.totalorder %s450, 0
      %s453 = sadd.s32 %s452, 1
      %s454 = scalar_select %p451, %s452, %s453
      %p457 = pneg %p451
      %p458 = scmp.eq.s32.totalorder %s40, 3
      %p459 = por %p457, %p458
      %p460 = scmp.ne.s32.totalorder %s452, %s455
      %p461 = scmp.eq.s32.totalorder %s40, 0
      %p462 = por %p460, %p461
      %p463 = scmp.ne.s32.totalorder %s452, %s455
      %p464 = scmp.eq.s32.totalorder %s45, 3
      %p465 = por %p463, %p464
      %p466 = scmp.ne.s32.totalorder %s455, %s456
      %p467 = scmp.eq.s32.totalorder %s45, 0
      %p468 = por %p466, %p467
      %p469 = scmp.ne.s32.totalorder %s455, %s456
      %p470 = scmp.eq.s32.totalorder %s46, 3
      %p471 = por %p469, %p470
      %p473 = scmp.ne.s32.totalorder %s456, %s472
      %p474 = scmp.eq.s32.totalorder %s46, 0
      %p475 = por %p473, %p474
      %s476 = ssub.s32 %s48, %s55
      %p477 = scmp.eq.s32.totalorder %s476, 0
      %s479 = sadd.s32 %s478, 1
      %s480 = scalar_select %p477, %s478, %s479
      %p483 = pneg %p477
      %p484 = scmp.eq.s32.totalorder %s40, 3
      %p485 = por %p483, %p484
      %p486 = scmp.ne.s32.totalorder %s478, %s481
      %p487 = scmp.eq.s32.totalorder %s40, 0
      %p488 = por %p486, %p487
      %p489 = scmp.ne.s32.totalorder %s478, %s481
      %p490 = scmp.eq.s32.totalorder %s45, 3
      %p491 = por %p489, %p490
      %p492 = scmp.ne.s32.totalorder %s481, %s482
      %p493 = scmp.eq.s32.totalorder %s45, 0
      %p494 = por %p492, %p493
      %p495 = scmp.ne.s32.totalorder %s481, %s482
      %p496 = scmp.eq.s32.totalorder %s46, 3
      %p497 = por %p495, %p496
      %p499 = scmp.ne.s32.totalorder %s482, %s498
      %p500 = scmp.eq.s32.totalorder %s46, 0
      %p501 = por %p499, %p500
      %s502 = ssub.s32 %s48, %s55
      %p503 = scmp.eq.s32.totalorder %s502, 0
      %s505 = sadd.s32 %s504, 1
      %s506 = scalar_select %p503, %s504, %s505
      %p509 = pneg %p503
      %p510 = scmp.eq.s32.totalorder %s40, 3
      %p511 = por %p509, %p510
      %p512 = scmp.ne.s32.totalorder %s504, %s507
      %p513 = scmp.eq.s32.totalorder %s40, 0
      %p514 = por %p512, %p513
      %p515 = scmp.ne.s32.totalorder %s504, %s507
      %p516 = scmp.eq.s32.totalorder %s45, 3
      %p517 = por %p515, %p516
      %p518 = scmp.ne.s32.totalorder %s507, %s508
      %p519 = scmp.eq.s32.totalorder %s45, 0
      %p520 = por %p518, %p519
      %p521 = scmp.ne.s32.totalorder %s507, %s508
      %p522 = scmp.eq.s32.totalorder %s46, 3
      %p523 = por %p521, %p522
      %p525 = scmp.ne.s32.totalorder %s508, %s524
      %p526 = scmp.eq.s32.totalorder %s46, 0
      %p527 = por %p525, %p526
      %s528 = ssub.s32 %s48, %s55
      %p529 = scmp.eq.s32.totalorder %s528, 0
      %s531 = sadd.s32 %s530, 1
      %s532 = scalar_select %p529, %s530, %s531
      %p535 = pneg %p529
      %p536 = scmp.eq.s32.totalorder %s40, 3
      %p537 = por %p535, %p536
      %p538 = scmp.ne.s32.totalorder %s530, %s533
      %p539 = scmp.eq.s32.totalorder %s40, 0
      %p540 = por %p538, %p539
      %p541 = scmp.ne.s32.totalorder %s530, %s533
      %p542 = scmp.eq.s32.totalorder %s45, 3
      %p543 = por %p541, %p542
      %p544 = scmp.ne.s32.totalorder %s533, %s534
      %p545 = scmp.eq.s32.totalorder %s45, 0
      %p546 = por %p544, %p545
      %p547 = scmp.ne.s32.totalorder %s533, %s534
      %p548 = scmp.eq.s32.totalorder %s46, 3
      %p549 = por %p547, %p548
      %p551 = scmp.ne.s32.totalorder %s534, %s550
      %p552 = scmp.eq.s32.totalorder %s46, 0
      %p553 = por %p551, %p552
      %s554 = ssub.s32 %s47, %s59
      %p555 = scmp.eq.s32.totalorder %s554, 0
      %s557 = sadd.s32 %s556, 1
      %s558 = scalar_select %p555, %s556, %s557
      %p561 = pneg %p555
      %p562 = scmp.eq.s32.totalorder %s40, 3
      %p563 = por %p561, %p562
      %p564 = scmp.ne.s32.totalorder %s556, %s559
      %p565 = scmp.eq.s32.totalorder %s40, 0
      %p566 = por %p564, %p565
      %p567 = scmp.ne.s32.totalorder %s556, %s559
      %p568 = scmp.eq.s32.totalorder %s45, 3
      %p569 = por %p567, %p568
      %p570 = scmp.ne.s32.totalorder %s559, %s560
      %p571 = scmp.eq.s32.totalorder %s45, 0
      %p572 = por %p570, %p571
      %p573 = scmp.ne.s32.totalorder %s559, %s560
      %p574 = scmp.eq.s32.totalorder %s46, 3
      %p575 = por %p573, %p574
      %p577 = scmp.ne.s32.totalorder %s560, %s576
      %p578 = scmp.eq.s32.totalorder %s46, 0
      %p579 = por %p577, %p578
      %p580 = scmp.le.s32.totalorder 1, %s40
      %p581 = scmp.lt.s32.totalorder %s40, 5
      %p582 = pnand %p580, %p581
      %p583 = pneg %p582
      // Predicated region
      $region9: #{tpu_custom_call.1} parent=5 // pred_check
        _
      $region10: #{tpu_custom_call.1} parent=5 // pred_check_branch
        %585 = sbr.rel (%p582) target = $region12
      $region11: #{tpu_custom_call.1} parent=5 // pred_region
        %s586 = ssub.s32 %s40, 1
      $region12: #{tpu_custom_call.1} parent=5 // pred_fallthru
        _
      %p587 = scmp.lt.s32.totalorder %s40, 4
      // Predicated region
      $region13: #{tpu_custom_call.1} parent=5 // pred_check
        %p588 = pneg %p587
      $region14: #{tpu_custom_call.1} parent=5 // pred_check_branch
        %590 = sbr.rel (%p588) target = $region16
      $region15: #{tpu_custom_call.1} parent=5 // pred_region
        // Predicated region
        $region17: #{tpu_custom_call.1} parent=15 // pred_check
          %p591 = pneg %p72
        $region18: #{tpu_custom_call.1} parent=15 // pred_check_branch
          %593 = sbr.rel (%p591) target = $region20
        $region19: #{tpu_custom_call.1} parent=15 // pred_region
          %s594 = sand.u32 %s62, 1
          %s595 = scalar_lea.sflag [#allocation5], %s594
          %s596 = sand.u32 %s62, 1
          %s597 = smul.addr %s596, 8
          %s598 = scalar_lea.vmem [#allocation4], %s597
          %600 = vsyncadd %s595, 0
          %s601 = smul.addr %s47, 8
          %s602 = scalar_lea.hbm %s0, %s601
          %s604 = sshll.u32 %s602, 4
          %s605 = int_to_ptr.hbm [resolvable:$true] %s604
          %s606 = sshll.u32 %s598, 4
          %s607 = int_to_ptr.vmem [resolvable:$true] %s606
          %609 = dma.hbm_to_vmem [thread:$0]  %s605, 128, %s607, %s595
        $region20: #{tpu_custom_call.1} parent=15 // pred_fallthru
          _
        // Predicated region
        $region21: #{tpu_custom_call.1} parent=15 // pred_check
          %p610 = pneg %p98
        $region22: #{tpu_custom_call.1} parent=15 // pred_check_branch
          %612 = sbr.rel (%p610) target = $region24
        $region23: #{tpu_custom_call.1} parent=15 // pred_region
          %s613 = sand.u32 %s40, 1
          %s614 = scalar_lea.sflag [#allocation8], %s613
          %s615 = sand.u32 %s88, 1
          %s616 = scalar_lea.vmem [#allocation7], %s615
          %618 = vsyncadd %s614, 0
          %s619 = scalar_lea.hbm %s1, %s47
          %s621 = sshll.u32 %s619, 4
          %s622 = int_to_ptr.hbm [resolvable:$true] %s621
          %s623 = sshll.u32 %s616, 4
          %s624 = int_to_ptr.vmem [resolvable:$true] %s623
          %626 = dma.hbm_to_vmem [thread:$0]  %s622, 16, %s624, %s614
        $region24: #{tpu_custom_call.1} parent=15 // pred_fallthru
          _
        // Predicated region
        $region25: #{tpu_custom_call.1} parent=15 // pred_check
          %p627 = pneg %p124
        $region26: #{tpu_custom_call.1} parent=15 // pred_check_branch
          %629 = sbr.rel (%p627) target = $region28
        $region27: #{tpu_custom_call.1} parent=15 // pred_region
          %s630 = sand.u32 %s40, 1
          %s631 = scalar_lea.sflag [#allocation8], %s630
          %s632 = sand.u32 %s114, 1
          %s633 = scalar_lea.vmem [#allocation9], %s632
          %635 = vsyncadd %s631, 0
          %s636 = scalar_lea.hbm %s2, %s48
          %s638 = sshll.u32 %s636, 4
          %s639 = int_to_ptr.hbm [resolvable:$true] %s638
          %s640 = sshll.u32 %s633, 4
          %s641 = int_to_ptr.vmem [resolvable:$true] %s640
          %643 = dma.hbm_to_vmem [thread:$0]  %s639, 16, %s641, %s631
        $region28: #{tpu_custom_call.1} parent=15 // pred_fallthru
          _
        // Predicated region
        $region29: #{tpu_custom_call.1} parent=15 // pred_check
          %p644 = pneg %p150
        $region30: #{tpu_custom_call.1} parent=15 // pred_check_branch
          %646 = sbr.rel (%p644) target = $region32
        $region31: #{tpu_custom_call.1} parent=15 // pred_region
          %p647 = scmp.lt.s32.totalorder %s48, 1
          %s648 = scalar_select %p647, %s48, 1
          %s649 = smul.addr %s648, 4
          %s650 = smul.addr %s649, 4
          %s651 = scalar_lea.vmem %s3, %s650
        $region32: #{tpu_custom_call.1} parent=15 // pred_fallthru
          _
        // Predicated region
        $region33: #{tpu_custom_call.1} parent=15 // pred_check
          %p652 = pneg %p176
        $region34: #{tpu_custom_call.1} parent=15 // pred_check_branch
          %654 = sbr.rel (%p652) target = $region36
        $region35: #{tpu_custom_call.1} parent=15 // pred_region
          %p655 = scmp.lt.s32.totalorder %s48, 1
          %s656 = scalar_select %p655, %s48, 1
          %s657 = scalar_lea.vmem %s4, %s656
        $region36: #{tpu_custom_call.1} parent=15 // pred_fallthru
          _
        // Predicated region
        $region37: #{tpu_custom_call.1} parent=15 // pred_check
          %p658 = pneg %p202
        $region38: #{tpu_custom_call.1} parent=15 // pred_check_branch
          %660 = sbr.rel (%p658) target = $region40
        $region39: #{tpu_custom_call.1} parent=15 // pred_region
          %p661 = scmp.lt.s32.totalorder %s48, 1
          %s662 = scalar_select %p661, %s48, 1
          %s663 = smul.addr %s662, 4
          %s664 = smul.addr %s663, 4
          %s665 = scalar_lea.vmem %s5, %s664
        $region40: #{tpu_custom_call.1} parent=15 // pred_fallthru
          _
        // Predicated region
        $region41: #{tpu_custom_call.1} parent=15 // pred_check
          %p666 = pneg %p228
        $region42: #{tpu_custom_call.1} parent=15 // pred_check_branch
          %668 = sbr.rel (%p666) target = $region44
        $region43: #{tpu_custom_call.1} parent=15 // pred_region
          %p669 = scmp.lt.s32.totalorder %s48, 1
          %s670 = scalar_select %p669, %s48, 1
          %s671 = scalar_lea.vmem %s6, %s670
        $region44: #{tpu_custom_call.1} parent=15 // pred_fallthru
          _
        // Predicated region
        $region45: #{tpu_custom_call.1} parent=15 // pred_check
          %p672 = pneg %p254
        $region46: #{tpu_custom_call.1} parent=15 // pred_check_branch
          %674 = sbr.rel (%p672) target = $region48
        $region47: #{tpu_custom_call.1} parent=15 // pred_region
          %p675 = scmp.lt.s32.totalorder %s48, 1
          %s676 = scalar_select %p675, %s48, 1
          %s677 = smul.addr %s676, 4
          %s678 = smul.addr %s677, 4
          %s679 = scalar_lea.vmem %s7, %s678
        $region48: #{tpu_custom_call.1} parent=15 // pred_fallthru
          _
        // Predicated region
        $region49: #{tpu_custom_call.1} parent=15 // pred_check
          %p680 = pneg %p280
        $region50: #{tpu_custom_call.1} parent=15 // pred_check_branch
          %682 = sbr.rel (%p680) target = $region52
        $region51: #{tpu_custom_call.1} parent=15 // pred_region
          %p683 = scmp.lt.s32.totalorder %s48, 1
          %s684 = scalar_select %p683, %s48, 1
          %s685 = scalar_lea.vmem %s8, %s684
        $region52: #{tpu_custom_call.1} parent=15 // pred_fallthru
          _
        // Predicated region
        $region53: #{tpu_custom_call.1} parent=15 // pred_check
          %p686 = pneg %p306
        $region54: #{tpu_custom_call.1} parent=15 // pred_check_branch
          %688 = sbr.rel (%p686) target = $region56
        $region55: #{tpu_custom_call.1} parent=15 // pred_region
          %s689 = sand.u32 %s40, 1
          %s690 = scalar_lea.sflag [#allocation11], %s689
          %s691 = sand.u32 %s296, 1
          %s692 = smul.addr %s691, 16
          %s693 = scalar_lea.vmem [#allocation10], %s692
          %695 = vsyncadd %s690, 0
          %s696 = smul.addr %s48, 4
          %s697 = smul.addr %s696, 4
          %s698 = scalar_lea.hbm %s9, %s697
          %s699 = sshll.u32 %s698, 4
          %s700 = int_to_ptr.hbm [resolvable:$true] %s699
          %s701 = sshll.u32 %s693, 4
          %s702 = int_to_ptr.vmem [resolvable:$true] %s701
          %707 = dma.hbm_to_vmem [thread:$0]  %s700, 256, %s702, %s690, 64, 64, 4
        $region56: #{tpu_custom_call.1} parent=15 // pred_fallthru
          _
        // Predicated region
        $region57: #{tpu_custom_call.1} parent=15 // pred_check
          %p708 = pneg %p332
        $region58: #{tpu_custom_call.1} parent=15 // pred_check_branch
          %710 = sbr.rel (%p708) target = $region60
        $region59: #{tpu_custom_call.1} parent=15 // pred_region
          %p711 = scmp.lt.s32.totalorder %s48, 1
          %s712 = scalar_select %p711, %s48, 1
          %s713 = scalar_lea.vmem %s10, %s712
        $region60: #{tpu_custom_call.1} parent=15 // pred_fallthru
          _
        // Predicated region
        $region61: #{tpu_custom_call.1} parent=15 // pred_check
          %p714 = pneg %p358
        $region62: #{tpu_custom_call.1} parent=15 // pred_check_branch
          %716 = sbr.rel (%p714) target = $region64
        $region63: #{tpu_custom_call.1} parent=15 // pred_region
          %s717 = sand.u32 %s40, 1
          %s718 = scalar_lea.sflag [#allocation11], %s717
          %s719 = sand.u32 %s348, 1
          %s720 = scalar_lea.vmem [#allocation12], %s719
          %722 = vsyncadd %s718, 0
          %s723 = scalar_lea.hbm %s11, %s48
          %s725 = sshll.u32 %s723, 4
          %s726 = int_to_ptr.hbm [resolvable:$true] %s725
          %s727 = sshll.u32 %s720, 4
          %s728 = int_to_ptr.vmem [resolvable:$true] %s727
          %730 = dma.hbm_to_vmem [thread:$0]  %s726, 16, %s728, %s718
        $region64: #{tpu_custom_call.1} parent=15 // pred_fallthru
          _
        // Predicated region
        $region65: #{tpu_custom_call.1} parent=15 // pred_check
          %p731 = pneg %p384
        $region66: #{tpu_custom_call.1} parent=15 // pred_check_branch
          %733 = sbr.rel (%p731) target = $region68
        $region67: #{tpu_custom_call.1} parent=15 // pred_region
          %p734 = scmp.lt.s32.totalorder %s48, 1
          %s735 = scalar_select %p734, %s48, 1
          %s736 = scalar_lea.vmem %s12, %s735
        $region68: #{tpu_custom_call.1} parent=15 // pred_fallthru
          _
        // Predicated region
        $region69: #{tpu_custom_call.1} parent=15 // pred_check
          %p737 = pneg %p410
        $region70: #{tpu_custom_call.1} parent=15 // pred_check_branch
          %739 = sbr.rel (%p737) target = $region72
        $region71: #{tpu_custom_call.1} parent=15 // pred_region
          %s740 = sand.u32 %s40, 1
          %s741 = scalar_lea.sflag [#allocation14], %s740
          %s742 = sand.u32 %s400, 1
          %s743 = smul.addr %s742, 16
          %s744 = scalar_lea.vmem [#allocation13], %s743
          %746 = vsyncadd %s741, 0
          %s747 = smul.addr %s48, 4
          %s748 = smul.addr %s747, 4
          %s749 = scalar_lea.hbm %s13, %s748
          %s750 = sshll.u32 %s749, 4
          %s751 = int_to_ptr.hbm [resolvable:$true] %s750
          %s752 = sshll.u32 %s744, 4
          %s753 = int_to_ptr.vmem [resolvable:$true] %s752
          %758 = dma.hbm_to_vmem [thread:$0]  %s751, 256, %s753, %s741, 64, 64, 4
        $region72: #{tpu_custom_call.1} parent=15 // pred_fallthru
          _
        // Predicated region
        $region73: #{tpu_custom_call.1} parent=15 // pred_check
          %p759 = pneg %p436
        $region74: #{tpu_custom_call.1} parent=15 // pred_check_branch
          %761 = sbr.rel (%p759) target = $region76
        $region75: #{tpu_custom_call.1} parent=15 // pred_region
          %p762 = scmp.lt.s32.totalorder %s48, 1
          %s763 = scalar_select %p762, %s48, 1
          %s764 = scalar_lea.vmem %s14, %s763
        $region76: #{tpu_custom_call.1} parent=15 // pred_fallthru
          _
        // Predicated region
        $region77: #{tpu_custom_call.1} parent=15 // pred_check
          %p765 = pneg %p462
        $region78: #{tpu_custom_call.1} parent=15 // pred_check_branch
          %767 = sbr.rel (%p765) target = $region80
        $region79: #{tpu_custom_call.1} parent=15 // pred_region
          %p768 = scmp.lt.s32.totalorder %s48, 1
          %s769 = scalar_select %p768, %s48, 1
          %s770 = smul.addr %s769, 8
          %s771 = smul.addr %s770, 4
          %s772 = scalar_lea.vmem %s15, %s771
        $region80: #{tpu_custom_call.1} parent=15 // pred_fallthru
          _
        // Predicated region
        $region81: #{tpu_custom_call.1} parent=15 // pred_check
          %p773 = pneg %p488
        $region82: #{tpu_custom_call.1} parent=15 // pred_check_branch
          %775 = sbr.rel (%p773) target = $region84
        $region83: #{tpu_custom_call.1} parent=15 // pred_region
          %p776 = scmp.lt.s32.totalorder %s48, 1
          %s777 = scalar_select %p776, %s48, 1
          %s778 = scalar_lea.vmem %s16, %s777
        $region84: #{tpu_custom_call.1} parent=15 // pred_fallthru
          _
        // Predicated region
        $region85: #{tpu_custom_call.1} parent=15 // pred_check
          %p779 = pneg %p514
        $region86: #{tpu_custom_call.1} parent=15 // pred_check_branch
          %781 = sbr.rel (%p779) target = $region88
        $region87: #{tpu_custom_call.1} parent=15 // pred_region
          %s782 = sand.u32 %s40, 1
          %s783 = scalar_lea.sflag [#allocation14], %s782
          %s784 = sand.u32 %s504, 1
          %s785 = scalar_lea.vmem [#allocation15], %s784
          %787 = vsyncadd %s783, 0
          %s788 = scalar_lea.hbm %s17, %s48
          %s790 = sshll.u32 %s788, 4
          %s791 = int_to_ptr.hbm [resolvable:$true] %s790
          %s792 = sshll.u32 %s785, 4
          %s793 = int_to_ptr.vmem [resolvable:$true] %s792
          %795 = dma.hbm_to_vmem [thread:$0]  %s791, 16, %s793, %s783
        $region88: #{tpu_custom_call.1} parent=15 // pred_fallthru
          _
        // Predicated region
        $region89: #{tpu_custom_call.1} parent=15 // pred_check
          %p796 = pneg %p540
        $region90: #{tpu_custom_call.1} parent=15 // pred_check_branch
          %798 = sbr.rel (%p796) target = $region92
        $region91: #{tpu_custom_call.1} parent=15 // pred_region
          %p799 = scmp.lt.s32.totalorder %s48, 1
          %s800 = scalar_select %p799, %s48, 1
          %s801 = scalar_lea.vmem %s18, %s800
        $region92: #{tpu_custom_call.1} parent=15 // pred_fallthru
          _
      $region16: #{tpu_custom_call.1} parent=5 // pred_fallthru
        _
      %p802 = scmp.le.s32.totalorder 1, %s40
      %p803 = scmp.lt.s32.totalorder %s40, 5
      %p804 = pnand %p802, %p803
      %p805 = pneg %p804
      // Predicated region
      $region93: #{tpu_custom_call.1} parent=5 // pred_check
        _
      $region94: #{tpu_custom_call.1} parent=5 // pred_check_branch
        %807 = sbr.rel (%p804) target = $region96
      $region95: #{tpu_custom_call.1} parent=5 // pred_region
        %s808 = ssub.s32 %s40, 1
        %s809 = sand.u32 %s65, 1
        %s810 = scalar_lea.sflag [#allocation5], %s809
        %s811 = sand.u32 %s65, 1
        %s812 = smul.addr %s811, 8
        %s813 = scalar_lea.vmem [#allocation4], %s812
        // Predicated region
        $region97: #{tpu_custom_call.1} parent=95 // pred_check
          %p814 = pneg %p78
        $region98: #{tpu_custom_call.1} parent=95 // pred_check_branch
          %816 = sbr.rel (%p814) target = $region100
        $region99: #{tpu_custom_call.1} parent=95 // pred_region
          %818 = dma.done %s810, 128
        $region100: #{tpu_custom_call.1} parent=95 // pred_fallthru
          _
        %s819 = sand.u32 %s45, 1
        %s820 = scalar_lea.sflag [#allocation8], %s819
        %s821 = sand.u32 %s91, 1
        %s822 = scalar_lea.vmem [#allocation7], %s821
        // Predicated region
        $region101: #{tpu_custom_call.1} parent=95 // pred_check
          %p823 = pneg %p104
        $region102: #{tpu_custom_call.1} parent=95 // pred_check_branch
          %825 = sbr.rel (%p823) target = $region104
        $region103: #{tpu_custom_call.1} parent=95 // pred_region
          %827 = dma.done %s820, 16
        $region104: #{tpu_custom_call.1} parent=95 // pred_fallthru
          _
        %s828 = sand.u32 %s45, 1
        %s829 = scalar_lea.sflag [#allocation8], %s828
        %s830 = sand.u32 %s117, 1
        %s831 = scalar_lea.vmem [#allocation9], %s830
        // Predicated region
        $region105: #{tpu_custom_call.1} parent=95 // pred_check
          %p832 = pneg %p130
        $region106: #{tpu_custom_call.1} parent=95 // pred_check_branch
          %834 = sbr.rel (%p832) target = $region108
        $region107: #{tpu_custom_call.1} parent=95 // pred_region
          %836 = dma.done %s829, 16
        $region108: #{tpu_custom_call.1} parent=95 // pred_fallthru
          _
        %s837 = sand.u32 %s45, 1
        %s838 = scalar_lea.sflag [#allocation11], %s837
        %s839 = sand.u32 %s299, 1
        %s840 = smul.addr %s839, 16
        %s841 = scalar_lea.vmem [#allocation10], %s840
        // Predicated region
        $region109: #{tpu_custom_call.1} parent=95 // pred_check
          %p842 = pneg %p312
        $region110: #{tpu_custom_call.1} parent=95 // pred_check_branch
          %844 = sbr.rel (%p842) target = $region112
        $region111: #{tpu_custom_call.1} parent=95 // pred_region
          %846 = dma.done %s838, 256
        $region112: #{tpu_custom_call.1} parent=95 // pred_fallthru
          _
        %s847 = sand.u32 %s45, 1
        %s848 = scalar_lea.sflag [#allocation11], %s847
        %s849 = sand.u32 %s351, 1
        %s850 = scalar_lea.vmem [#allocation12], %s849
        // Predicated region
        $region113: #{tpu_custom_call.1} parent=95 // pred_check
          %p851 = pneg %p364
        $region114: #{tpu_custom_call.1} parent=95 // pred_check_branch
          %853 = sbr.rel (%p851) target = $region116
        $region115: #{tpu_custom_call.1} parent=95 // pred_region
          %855 = dma.done %s848, 16
        $region116: #{tpu_custom_call.1} parent=95 // pred_fallthru
          _
        %s856 = sand.u32 %s45, 1
        %s857 = scalar_lea.sflag [#allocation14], %s856
        %s858 = sand.u32 %s403, 1
        %s859 = smul.addr %s858, 16
        %s860 = scalar_lea.vmem [#allocation13], %s859
        // Predicated region
        $region117: #{tpu_custom_call.1} parent=95 // pred_check
          %p861 = pneg %p416
        $region118: #{tpu_custom_call.1} parent=95 // pred_check_branch
          %863 = sbr.rel (%p861) target = $region120
        $region119: #{tpu_custom_call.1} parent=95 // pred_region
          %865 = dma.done %s857, 256
        $region120: #{tpu_custom_call.1} parent=95 // pred_fallthru
          _
        %s866 = sand.u32 %s45, 1
        %s867 = scalar_lea.sflag [#allocation14], %s866
        %s868 = sand.u32 %s507, 1
        %s869 = scalar_lea.vmem [#allocation15], %s868
        // Predicated region
        $region121: #{tpu_custom_call.1} parent=95 // pred_check
          %p870 = pneg %p520
        $region122: #{tpu_custom_call.1} parent=95 // pred_check_branch
          %872 = sbr.rel (%p870) target = $region124
        $region123: #{tpu_custom_call.1} parent=95 // pred_region
          %874 = dma.done %s867, 16
        $region124: #{tpu_custom_call.1} parent=95 // pred_fallthru
          _
        %s875 = sand.u32 %s65, 1
        %s876 = scalar_lea.sflag [#allocation5], %s875
        %s877 = sand.u32 %s65, 1
        %s878 = smul.addr %s877, 8
        %s879 = scalar_lea.vmem [#allocation4], %s878
        %p880 = pneg %p78
        %p881 = pneg %p75
        %s882 = sand.u32 %s45, 1
        %s883 = scalar_lea.sflag [#allocation8], %s882
        %s884 = sand.u32 %s91, 1
        %s885 = scalar_lea.vmem [#allocation7], %s884
        %p886 = pneg %p104
        %p887 = pneg %p101
        %s888 = sand.u32 %s45, 1
        %s889 = scalar_lea.sflag [#allocation8], %s888
        %s890 = sand.u32 %s117, 1
        %s891 = scalar_lea.vmem [#allocation9], %s890
        %p892 = pneg %p130
        %p893 = pneg %p127
        %p894 = scmp.lt.s32.totalorder %s50, 1
        %s895 = scalar_select %p894, %s50, 1
        %s896 = smul.addr %s895, 4
        %s897 = smul.addr %s896, 4
        %s898 = scalar_lea.vmem %s3, %s897
        %p899 = pneg %p156
        %p900 = pneg %p153
        %p901 = scmp.lt.s32.totalorder %s50, 1
        %s902 = scalar_select %p901, %s50, 1
        %s903 = scalar_lea.vmem %s4, %s902
        %p904 = pneg %p182
        %p905 = pneg %p179
        %p906 = scmp.lt.s32.totalorder %s50, 1
        %s907 = scalar_select %p906, %s50, 1
        %s908 = smul.addr %s907, 4
        %s909 = smul.addr %s908, 4
        %s910 = scalar_lea.vmem %s5, %s909
        %p911 = pneg %p208
        %p912 = pneg %p205
        %p913 = scmp.lt.s32.totalorder %s50, 1
        %s914 = scalar_select %p913, %s50, 1
        %s915 = scalar_lea.vmem %s6, %s914
        %p916 = pneg %p234
        %p917 = pneg %p231
        %p918 = scmp.lt.s32.totalorder %s50, 1
        %s919 = scalar_select %p918, %s50, 1
        %s920 = smul.addr %s919, 4
        %s921 = smul.addr %s920, 4
        %s922 = scalar_lea.vmem %s7, %s921
        %p923 = pneg %p260
        %p924 = pneg %p257
        %p925 = scmp.lt.s32.totalorder %s50, 1
        %s926 = scalar_select %p925, %s50, 1
        %s927 = scalar_lea.vmem %s8, %s926
        %p928 = pneg %p286
        %p929 = pneg %p283
        %s930 = sand.u32 %s45, 1
        %s931 = scalar_lea.sflag [#allocation11], %s930
        %s932 = sand.u32 %s299, 1
        %s933 = smul.addr %s932, 16
        %s934 = scalar_lea.vmem [#allocation10], %s933
        %p935 = pneg %p312
        %p936 = pneg %p309
        %p937 = scmp.lt.s32.totalorder %s50, 1
        %s938 = scalar_select %p937, %s50, 1
        %s939 = scalar_lea.vmem %s10, %s938
        %p940 = pneg %p338
        %p941 = pneg %p335
        %s942 = sand.u32 %s45, 1
        %s943 = scalar_lea.sflag [#allocation11], %s942
        %s944 = sand.u32 %s351, 1
        %s945 = scalar_lea.vmem [#allocation12], %s944
        %p946 = pneg %p364
        %p947 = pneg %p361
        %p948 = scmp.lt.s32.totalorder %s50, 1
        %s949 = scalar_select %p948, %s50, 1
        %s950 = scalar_lea.vmem %s12, %s949
        %p951 = pneg %p390
        %p952 = pneg %p387
        %s953 = sand.u32 %s45, 1
        %s954 = scalar_lea.sflag [#allocation14], %s953
        %s955 = sand.u32 %s403, 1
        %s956 = smul.addr %s955, 16
        %s957 = scalar_lea.vmem [#allocation13], %s956
        %p958 = pneg %p416
        %p959 = pneg %p413
        %p960 = scmp.lt.s32.totalorder %s50, 1
        %s961 = scalar_select %p960, %s50, 1
        %s962 = scalar_lea.vmem %s14, %s961
        %p963 = pneg %p442
        %p964 = pneg %p439
        %p965 = scmp.lt.s32.totalorder %s50, 1
        %s966 = scalar_select %p965, %s50, 1
        %s967 = smul.addr %s966, 8
        %s968 = smul.addr %s967, 4
        %s969 = scalar_lea.vmem %s15, %s968
        %p970 = pneg %p468
        %p971 = pneg %p465
        %p972 = scmp.lt.s32.totalorder %s50, 1
        %s973 = scalar_select %p972, %s50, 1
        %s974 = scalar_lea.vmem %s16, %s973
        %p975 = pneg %p494
        %p976 = pneg %p491
        %s977 = sand.u32 %s45, 1
        %s978 = scalar_lea.sflag [#allocation14], %s977
        %s979 = sand.u32 %s507, 1
        %s980 = scalar_lea.vmem [#allocation15], %s979
        %p981 = pneg %p520
        %p982 = pneg %p517
        %p983 = scmp.lt.s32.totalorder %s50, 1
        %s984 = scalar_select %p983, %s50, 1
        %s985 = scalar_lea.vmem %s18, %s984
        %p986 = pneg %p546
        %p987 = pneg %p543
        %p988 = pneg %p572
        %p989 = pneg %p569
        %s990 = sand.u32 %s559, 1
        %s991 = scalar_lea.sflag [#allocation6], %s990
        %s992 = sand.u32 %s559, 1
        %s993 = smul.addr %s992, 8
        %s994 = scalar_lea.vmem [#allocation16], %s993
        %p995 = scmp.lt.s32.totalorder %s50, 1
        %s996 = scalar_select %p995, %s50, 1
        %s997 = smul.addr %s996, 4
        %s998 = smul.addr %s997, 4
        %s999 = scalar_lea.vmem %s3, %s998
        %p1000 = scmp.lt.s32.totalorder %s50, 1
        %s1001 = scalar_select %p1000, %s50, 1
        %s1002 = scalar_lea.vmem %s4, %s1001
        %p1003 = scmp.lt.s32.totalorder %s50, 1
        %s1004 = scalar_select %p1003, %s50, 1
        %s1005 = smul.addr %s1004, 4
        %s1006 = smul.addr %s1005, 4
        %s1007 = scalar_lea.vmem %s5, %s1006
        %p1008 = scmp.lt.s32.totalorder %s50, 1
        %s1009 = scalar_select %p1008, %s50, 1
        %s1010 = scalar_lea.vmem %s6, %s1009
        %p1011 = scmp.lt.s32.totalorder %s50, 1
        %s1012 = scalar_select %p1011, %s50, 1
        %s1013 = smul.addr %s1012, 4
        %s1014 = smul.addr %s1013, 4
        %s1015 = scalar_lea.vmem %s7, %s1014
        %p1016 = scmp.lt.s32.totalorder %s50, 1
        %s1017 = scalar_select %p1016, %s50, 1
        %s1018 = scalar_lea.vmem %s8, %s1017
        %p1019 = scmp.lt.s32.totalorder %s50, 1
        %s1020 = scalar_select %p1019, %s50, 1
        %s1021 = scalar_lea.vmem %s10, %s1020
        %p1022 = scmp.lt.s32.totalorder %s50, 1
        %s1023 = scalar_select %p1022, %s50, 1
        %s1024 = scalar_lea.vmem %s12, %s1023
        %p1025 = scmp.lt.s32.totalorder %s50, 1
        %s1026 = scalar_select %p1025, %s50, 1
        %s1027 = scalar_lea.vmem %s14, %s1026
        %p1028 = scmp.lt.s32.totalorder %s50, 1
        %s1029 = scalar_select %p1028, %s50, 1
        %s1030 = smul.addr %s1029, 8
        %s1031 = smul.addr %s1030, 4
        %s1032 = scalar_lea.vmem %s15, %s1031
        %p1033 = scmp.lt.s32.totalorder %s50, 1
        %s1034 = scalar_select %p1033, %s50, 1
        %s1035 = scalar_lea.vmem %s16, %s1034
        %p1036 = scmp.lt.s32.totalorder %s50, 1
        %s1037 = scalar_select %p1036, %s50, 1
        %s1038 = scalar_lea.vmem %s18, %s1037
        %p1040 = scmp.eq.s32.totalorder %s50, 0
        // Predicated region
        $region125: #{tpu_custom_call.1} parent=95 // pred_check
          %p1041 = pneg %p1040
        $region126: #{tpu_custom_call.1} parent=95 // pred_check_branch
          %1043 = sbr.rel (%p1041) target = $region128
        $region127: #{tpu_custom_call.1} parent=95 // pred_region
          %v1044 = vld [vmem:[%s813] sm:$0xff]
          %vm1045 = vcmask 261120
          %1046 = vst.msk [vmem:[#allocation2] sm:$0xff] %vm1045, %v1044
        $region128: #{tpu_custom_call.1} parent=95 // pred_fallthru
          _
        %v1047 = vld [vmem:[#allocation2] sm:$0xff]
        %v1048 = vpack.c.bf16 %v1047, %v1047
        %v1049 = vld [vmem:[%s999] sm:$0xf]
        %v1050 = vld [vmem:[%s999 + $0x4] sm:$0xf]
        %v1051 = vld [vmem:[%s999 + $0x8] sm:$0xf]
        %v1052 = vld [vmem:[%s999 + $0xc] sm:$0xf]
        %v1053 = vld [vmem:[%s1002] sm:$0x1]
        %v1055 = vperm.slane %v1053, 0
        %v1061 = vunpack.c.l.b16 %v1049
        %v1062 = vunpack.c.l.b16 %v1050
        %v1063 = vunpack.c.l.b16 %v1051
        %v1064 = vunpack.c.l.b16 %v1052
        %v1065 = vpack.c.b16 %v1062, %v1061
        %v1066 = vpack.c.b16 %v1064, %v1063
        %vm1069 = vcmask 261120
        %v1071 = vsel %vm1069, %v1048, 0
        %1073 = vmatpush.bf16.msra.mxu0 0
        %1074 = vmatpush.bf16.msra.mxu0 0
        %1075 = vmatpush.bf16.msra.mxu0 0
        %1076 = vmatpush.bf16.msra.mxu0 0
        %1077 = vmatpush.bf16.msra.mxu0 0
        %1078 = vmatpush.bf16.msra.mxu0 0
        %1079 = vmatpush.bf16.msra.mxu0 %v1066
        %1080 = vmatpush.bf16.msra.mxu0 %v1065
        %1081 = vmatmul.bf16.gmra.mxu0 %v1071
        %v1082 = vpop.f32.mrf.mxu0
        %v1083 = vadd.f32 %v1055, %v1082
        %v1084 = vpop.f32.mrf.mxu0
        %1085 = vdwg.mxu0
        %v1086 = vld [vmem:[%s1007] sm:$0xf]
        %v1087 = vld [vmem:[%s1007 + $0x4] sm:$0xf]
        %v1088 = vld [vmem:[%s1007 + $0x8] sm:$0xf]
        %v1089 = vld [vmem:[%s1007 + $0xc] sm:$0xf]
        %v1090 = vld [vmem:[%s1010] sm:$0x1]
        %v1092 = vperm.slane %v1090, 0
        %v1098 = vunpack.c.l.b16 %v1086
        %v1099 = vunpack.c.l.b16 %v1087
        %v1100 = vunpack.c.l.b16 %v1088
        %v1101 = vunpack.c.l.b16 %v1089
        %v1102 = vpack.c.b16 %v1099, %v1098
        %v1103 = vpack.c.b16 %v1101, %v1100
        %1106 = vmatpush.bf16.msra.mxu0 0
        %1107 = vmatpush.bf16.msra.mxu0 0
        %1108 = vmatpush.bf16.msra.mxu0 0
        %1109 = vmatpush.bf16.msra.mxu0 0
        %1110 = vmatpush.bf16.msra.mxu0 0
        %1111 = vmatpush.bf16.msra.mxu0 0
        %1112 = vmatpush.bf16.msra.mxu0 %v1103
        %1113 = vmatpush.bf16.msra.mxu0 %v1102
        %1114 = vmatmul.bf16.gmra.mxu0 %v1071
        %v1115 = vpop.f32.mrf.mxu0
        %v1116 = vadd.f32 %v1092, %v1115
        %v1117 = vpop.f32.mrf.mxu0
        %1118 = vdwg.mxu0
        %v1119 = vld [vmem:[%s1015] sm:$0xf]
        %v1120 = vld [vmem:[%s1015 + $0x4] sm:$0xf]
        %v1121 = vld [vmem:[%s1015 + $0x8] sm:$0xf]
        %v1122 = vld [vmem:[%s1015 + $0xc] sm:$0xf]
        %v1123 = vld [vmem:[%s1018] sm:$0x1]
        %v1125 = vperm.slane %v1123, 0
        %v1131 = vunpack.c.l.b16 %v1119
        %v1132 = vunpack.c.l.b16 %v1120
        %v1133 = vunpack.c.l.b16 %v1121
        %v1134 = vunpack.c.l.b16 %v1122
        %v1135 = vpack.c.b16 %v1132, %v1131
        %v1136 = vpack.c.b16 %v1134, %v1133
        %1139 = vmatpush.bf16.msra.mxu0 0
        %1140 = vmatpush.bf16.msra.mxu0 0
        %1141 = vmatpush.bf16.msra.mxu0 0
        %1142 = vmatpush.bf16.msra.mxu0 0
        %1143 = vmatpush.bf16.msra.mxu0 0
        %1144 = vmatpush.bf16.msra.mxu0 0
        %1145 = vmatpush.bf16.msra.mxu0 %v1136
        %1146 = vmatpush.bf16.msra.mxu0 %v1135
        %1147 = vmatmul.bf16.gmra.mxu0 %v1071
        %v1148 = vpop.f32.mrf.mxu0
        %v1149 = vadd.f32 %v1125, %v1148
        %v1150 = vpop.f32.mrf.mxu0
        %1151 = vdwg.mxu0
        %v1152 = vpack.c.bf16 %v1083, %v1083
        %v1153 = vpack.c.bf16 %v1116, %v1116
        %v1154 = vpack.c.bf16 %v1149, %v1149
        %v1155 = vld [vmem:[%s822] sm:$0x1]
        %vm1156 = vcmp.eq.f32.partialorder %v1155, 0.0
        %v1157 = vld [vmem:[%s831] sm:$0x1]
        %vm1158 = vcmask 64512
        %v1160 = vsel %vm1158, %v1152, 0
        %v1163 = vsel %vm1158, %v1153, 0
        %1165 = vmatpush.bf16.xpose.msra.mxu0 0
        %1166 = vmatpush.bf16.xpose.msra.mxu0 0
        %1167 = vmatpush.bf16.xpose.msra.mxu0 0
        %1168 = vmatpush.bf16.xpose.msra.mxu0 0
        %1169 = vmatpush.bf16.xpose.msra.mxu0 0
        %1170 = vmatpush.bf16.xpose.msra.mxu0 0
        %1171 = vmatpush.bf16.xpose.msra.mxu0 0
        %1172 = vmatpush.bf16.xpose.msra.mxu0 %v1163
        %1173 = vmatmul.bf16.gmra.mxu0 %v1160
        %v1174 = vpop.f32.mrf.mxu0
        %v1175 = vadd.f32 0.0, %v1174
        %v1176 = vpop.f32.mrf.mxu0
        %1177 = vdwg.mxu0
        %v1178 = vsel %vm1156, 1, 0
        %v1179 = vperm.slane %v1178, 0
        %vm1180 = vcmp.eq.s32.totalorder %v1179, 1
        %v1181 = vsel %vm1180, -3.4028235e+38, %v1175
        %v1182 = vsel %vm1158, %v1181, -inf
        %1183 = vmax.xlane.f32.xlu0 %v1182
        %v1184 = vpop.xlane.xlu0 %1183
        %v1185 = vsub.f32 %v1181, %v1184
        %v1186 = vmul.f32 %v1185, 1.442695
        %v1187 = vpow.pop %v1186
        %v1188 = vsel %vm1158, %v1187, 0.0
        %1189 = vadd.xlane.f32.xlu0 %v1188
        %v1190 = vpop.xlane.xlu0 %1189
        %v1191 = vrcp.pop %v1190
        %v1192 = vmul.f32 %v1187, %v1191
        %v1193 = vpack.c.bf16 %v1192, %v1192
        %v1195 = vsel %vm1158, %v1193, 0
        %vm1197 = vcmask 1043456
        %v1199 = vsel %vm1197, %v1154, 0
        %1201 = vmatpush.bf16.msra.mxu0 0
        %1202 = vmatpush.bf16.msra.mxu0 0
        %1203 = vmatpush.bf16.msra.mxu0 0
        %1204 = vmatpush.bf16.msra.mxu0 0
        %1205 = vmatpush.bf16.msra.mxu0 0
        %1206 = vmatpush.bf16.msra.mxu0 0
        %1207 = vmatpush.bf16.msra.mxu0 0
        %1208 = vmatpush.bf16.msra.mxu0 %v1199
        %1209 = vmatmul.bf16.gmra.mxu0 %v1195
        %v1210 = vpop.f32.mrf.mxu0
        %v1211 = vadd.f32 0.0, %v1210
        %v1212 = vpop.f32.mrf.mxu0
        %1213 = vdwg.mxu0
        %v1215 = vperm.slane %v1157, 0
        %1216 = vset.pattern.permute.xlu0 0
        %1217 = vperm.xlu0 %1216, %v1215
        %v1218 = vpop.permute.xlu0 %1217
        %v1220 = vmul.f32 %v1211, %v1218
        %v1221 = vpack.c.bf16 %v1220, %v1220
        %vm1222 = vcmask 60416
        %1223 = vst.msk [vmem:[#allocation3] sm:$0xf] %vm1222, %v1221
        %v1225 = vunpack.c.l.b16 %v1152
        %v1226 = vpack.c.b16 %v1225, %v1225
        %1227 = vrot.lane.b32.xlu0 %v1226, 120
        %v1228 = vpop.permute.xlu0 %1227
        %v1230 = vunpack.c.l.b16 %v1153
        %v1231 = vpack.c.b16 %v1230, %v1230
        %1232 = vrot.lane.b32.xlu0 %v1231, 120
        %v1233 = vpop.permute.xlu0 %1232
        %v1235 = vsel %vm1158, %v1228, 0
        %v1238 = vsel %vm1158, %v1233, 0
        %1240 = vmatpush.bf16.xpose.msra.mxu0 0
        %1241 = vmatpush.bf16.xpose.msra.mxu0 0
        %1242 = vmatpush.bf16.xpose.msra.mxu0 0
        %1243 = vmatpush.bf16.xpose.msra.mxu0 0
        %1244 = vmatpush.bf16.xpose.msra.mxu0 0
        %1245 = vmatpush.bf16.xpose.msra.mxu0 0
        %1246 = vmatpush.bf16.xpose.msra.mxu0 0
        %1247 = vmatpush.bf16.xpose.msra.mxu0 %v1238
        %1248 = vmatmul.bf16.gmra.mxu0 %v1235
        %v1249 = vpop.f32.mrf.mxu0
        %v1250 = vadd.f32 0.0, %v1249
        %v1251 = vpop.f32.mrf.mxu0
        %1252 = vdwg.mxu0
        %v1253 = vsel %vm1180, -3.4028235e+38, %v1250
        %v1254 = vsel %vm1158, %v1253, -inf
        %1255 = vmax.xlane.f32.xlu0 %v1254
        %v1256 = vpop.xlane.xlu0 %1255
        %v1257 = vsub.f32 %v1253, %v1256
        %v1258 = vmul.f32 %v1257, 1.442695
        %v1259 = vpow.pop %v1258
        %v1260 = vsel %vm1158, %v1259, 0.0
        %1261 = vadd.xlane.f32.xlu0 %v1260
        %v1262 = vpop.xlane.xlu0 %1261
        %v1263 = vrcp.pop %v1262
        %v1264 = vmul.f32 %v1259, %v1263
        %v1265 = vpack.c.bf16 %v1264, %v1264
        %v1267 = vunpack.c.l.b16 %v1154
        %v1268 = vpack.c.b16 %v1267, %v1267
        %1269 = vrot.lane.b32.xlu0 %v1268, 120
        %v1270 = vpop.permute.xlu0 %1269
        %v1272 = vsel %vm1158, %v1265, 0
        %v1275 = vsel %vm1197, %v1270, 0
        %1277 = vmatpush.bf16.msra.mxu0 0
        %1278 = vmatpush.bf16.msra.mxu0 0
        %1279 = vmatpush.bf16.msra.mxu0 0
        %1280 = vmatpush.bf16.msra.mxu0 0
        %1281 = vmatpush.bf16.msra.mxu0 0
        %1282 = vmatpush.bf16.msra.mxu0 0
        %1283 = vmatpush.bf16.msra.mxu0 0
        %1284 = vmatpush.bf16.msra.mxu0 %v1275
        %1285 = vmatmul.bf16.gmra.mxu0 %v1272
        %v1286 = vpop.f32.mrf.mxu0
        %v1287 = vadd.f32 0.0, %v1286
        %v1288 = vpop.f32.mrf.mxu0
        %1289 = vdwg.mxu0
        %1290 = vset.pattern.permute.xlu0 1
        %1291 = vperm.xlu0 %1290, %v1215
        %v1292 = vpop.permute.xlu0 %1291
        %v1294 = vmul.f32 %v1287, %v1292
        %v1295 = vpack.c.bf16 %v1294, %v1294
        %1297 = vrot.lane.b32.xlu0 %v1295, 8
        %v1298 = vpop.permute.xlu0 %1297
        %vm1300 = vcmask 126016
        %1301 = vst.msk [vmem:[#allocation3] sm:$0xf] %vm1300, %v1298
        %1302 = vrot.lane.b32.xlu0 %v1226, 112
        %v1303 = vpop.permute.xlu0 %1302
        %1304 = vrot.lane.b32.xlu0 %v1231, 112
        %v1305 = vpop.permute.xlu0 %1304
        %v1307 = vsel %vm1158, %v1303, 0
        %v1310 = vsel %vm1158, %v1305, 0
        %1312 = vmatpush.bf16.xpose.msra.mxu0 0
        %1313 = vmatpush.bf16.xpose.msra.mxu0 0
        %1314 = vmatpush.bf16.xpose.msra.mxu0 0
        %1315 = vmatpush.bf16.xpose.msra.mxu0 0
        %1316 = vmatpush.bf16.xpose.msra.mxu0 0
        %1317 = vmatpush.bf16.xpose.msra.mxu0 0
        %1318 = vmatpush.bf16.xpose.msra.mxu0 0
        %1319 = vmatpush.bf16.xpose.msra.mxu0 %v1310
        %1320 = vmatmul.bf16.gmra.mxu0 %v1307
        %v1321 = vpop.f32.mrf.mxu0
        %v1322 = vadd.f32 0.0, %v1321
        %v1323 = vpop.f32.mrf.mxu0
        %1324 = vdwg.mxu0
        %v1325 = vsel %vm1180, -3.4028235e+38, %v1322
        %v1326 = vsel %vm1158, %v1325, -inf
        %1327 = vmax.xlane.f32.xlu0 %v1326
        %v1328 = vpop.xlane.xlu0 %1327
        %v1329 = vsub.f32 %v1325, %v1328
        %v1330 = vmul.f32 %v1329, 1.442695
        %v1331 = vpow.pop %v1330
        %v1332 = vsel %vm1158, %v1331, 0.0
        %1333 = vadd.xlane.f32.xlu0 %v1332
        %v1334 = vpop.xlane.xlu0 %1333
        %v1335 = vrcp.pop %v1334
        %v1336 = vmul.f32 %v1331, %v1335
        %v1337 = vpack.c.bf16 %v1336, %v1336
        %1338 = vrot.lane.b32.xlu0 %v1268, 112
        %v1339 = vpop.permute.xlu0 %1338
        %v1341 = vsel %vm1158, %v1337, 0
        %v1344 = vsel %vm1197, %v1339, 0
        %1346 = vmatpush.bf16.msra.mxu0 0
        %1347 = vmatpush.bf16.msra.mxu0 0
        %1348 = vmatpush.bf16.msra.mxu0 0
        %1349 = vmatpush.bf16.msra.mxu0 0
        %1350 = vmatpush.bf16.msra.mxu0 0
        %1351 = vmatpush.bf16.msra.mxu0 0
        %1352 = vmatpush.bf16.msra.mxu0 0
        %1353 = vmatpush.bf16.msra.mxu0 %v1344
        %1354 = vmatmul.bf16.gmra.mxu0 %v1341
        %v1355 = vpop.f32.mrf.mxu0
        %v1356 = vadd.f32 0.0, %v1355
        %v1357 = vpop.f32.mrf.mxu0
        %1358 = vdwg.mxu0
        %1359 = vset.pattern.permute.xlu0 2
        %1360 = vperm.xlu0 %1359, %v1215
        %v1361 = vpop.permute.xlu0 %1360
        %v1363 = vmul.f32 %v1356, %v1361
        %v1364 = vpack.c.bf16 %v1363, %v1363
        %1366 = vrot.lane.b32.xlu0 %v1364, 16
        %v1367 = vpop.permute.xlu0 %1366
        %vm1369 = vcmask 191616
        %1370 = vst.msk [vmem:[#allocation3] sm:$0xf] %vm1369, %v1367
        %1371 = vrot.lane.b32.xlu0 %v1226, 104
        %v1372 = vpop.permute.xlu0 %1371
        %1373 = vrot.lane.b32.xlu0 %v1231, 104
        %v1374 = vpop.permute.xlu0 %1373
        %v1376 = vsel %vm1158, %v1372, 0
        %v1379 = vsel %vm1158, %v1374, 0
        %1381 = vmatpush.bf16.xpose.msra.mxu0 0
        %1382 = vmatpush.bf16.xpose.msra.mxu0 0
        %1383 = vmatpush.bf16.xpose.msra.mxu0 0
        %1384 = vmatpush.bf16.xpose.msra.mxu0 0
        %1385 = vmatpush.bf16.xpose.msra.mxu0 0
        %1386 = vmatpush.bf16.xpose.msra.mxu0 0
        %1387 = vmatpush.bf16.xpose.msra.mxu0 0
        %1388 = vmatpush.bf16.xpose.msra.mxu0 %v1379
        %1389 = vmatmul.bf16.gmra.mxu0 %v1376
        %v1390 = vpop.f32.mrf.mxu0
        %v1391 = vadd.f32 0.0, %v1390
        %v1392 = vpop.f32.mrf.mxu0
        %1393 = vdwg.mxu0
        %v1394 = vsel %vm1180, -3.4028235e+38, %v1391
        %v1395 = vsel %vm1158, %v1394, -inf
        %1396 = vmax.xlane.f32.xlu0 %v1395
        %v1397 = vpop.xlane.xlu0 %1396
        %v1398 = vsub.f32 %v1394, %v1397
        %v1399 = vmul.f32 %v1398, 1.442695
        %v1400 = vpow.pop %v1399
        %v1401 = vsel %vm1158, %v1400, 0.0
        %1402 = vadd.xlane.f32.xlu0 %v1401
        %v1403 = vpop.xlane.xlu0 %1402
        %v1404 = vrcp.pop %v1403
        %v1405 = vmul.f32 %v1400, %v1404
        %v1406 = vpack.c.bf16 %v1405, %v1405
        %1407 = vrot.lane.b32.xlu0 %v1268, 104
        %v1408 = vpop.permute.xlu0 %1407
        %v1410 = vsel %vm1158, %v1406, 0
        %v1413 = vsel %vm1197, %v1408, 0
        %1415 = vmatpush.bf16.msra.mxu0 0
        %1416 = vmatpush.bf16.msra.mxu0 0
        %1417 = vmatpush.bf16.msra.mxu0 0
        %1418 = vmatpush.bf16.msra.mxu0 0
        %1419 = vmatpush.bf16.msra.mxu0 0
        %1420 = vmatpush.bf16.msra.mxu0 0
        %1421 = vmatpush.bf16.msra.mxu0 0
        %1422 = vmatpush.bf16.msra.mxu0 %v1413
        %1423 = vmatmul.bf16.gmra.mxu0 %v1410
        %v1424 = vpop.f32.mrf.mxu0
        %v1425 = vadd.f32 0.0, %v1424
        %v1426 = vpop.f32.mrf.mxu0
        %1427 = vdwg.mxu0
        %1428 = vset.pattern.permute.xlu0 3
        %1429 = vperm.xlu0 %1428, %v1215
        %v1430 = vpop.permute.xlu0 %1429
        %v1432 = vmul.f32 %v1425, %v1430
        %v1433 = vpack.c.bf16 %v1432, %v1432
        %1435 = vrot.lane.b32.xlu0 %v1433, 24
        %v1436 = vpop.permute.xlu0 %1435
        %vm1438 = vcmask 257216
        %1439 = vst.msk [vmem:[#allocation3] sm:$0xf] %vm1438, %v1436
        %v1440 = vld [vmem:[#allocation3] sm:$0xf]
        %v1441 = vld [vmem:[%s841] sm:$0xf]
        %v1442 = vld [vmem:[%s841 + $0x4] sm:$0xf]
        %v1443 = vld [vmem:[%s841 + $0x8] sm:$0xf]
        %v1444 = vld [vmem:[%s841 + $0xc] sm:$0xf]
        %v1445 = vld [vmem:[%s1021] sm:$0x1]
        %v1447 = vperm.slane %v1445, 0
        %v1453 = vunpack.c.l.b16 %v1441
        %v1454 = vunpack.c.l.b16 %v1442
        %v1455 = vunpack.c.l.b16 %v1443
        %v1456 = vunpack.c.l.b16 %v1444
        %v1457 = vpack.c.b16 %v1454, %v1453
        %v1458 = vpack.c.b16 %v1456, %v1455
        %v1462 = vsel %vm1069, %v1440, 0
        %1464 = vmatpush.bf16.msra.mxu0 0
        %1465 = vmatpush.bf16.msra.mxu0 0
        %1466 = vmatpush.bf16.msra.mxu0 0
        %1467 = vmatpush.bf16.msra.mxu0 0
        %1468 = vmatpush.bf16.msra.mxu0 0
        %1469 = vmatpush.bf16.msra.mxu0 0
        %1470 = vmatpush.bf16.msra.mxu0 %v1458
        %1471 = vmatpush.bf16.msra.mxu0 %v1457
        %1472 = vmatmul.bf16.gmra.mxu0 %v1462
        %v1473 = vpop.f32.mrf.mxu0
        %v1474 = vadd.f32 %v1447, %v1473
        %v1475 = vpop.f32.mrf.mxu0
        %1476 = vdwg.mxu0
        %v1477 = vadd.f32 %v1474, %v1047
        %v1478 = vld [vmem:[%s850] sm:$0x1]
        %v1479 = vld [vmem:[%s1024] sm:$0x1]
        %v1480 = vsel %vm1069, %v1477, 0.0
        %1481 = vadd.xlane.f32.xlu0 %v1480
        %v1482 = vpop.xlane.xlu0 %1481
        %v1483 = vrcp.pop 32.0
        %v1484 = vmul.f32 32.0, %v1483
        %v1485 = vsub.f32 1.0, %v1484
        %v1486 = vmul.f32 %v1483, %v1485
        %v1487 = vadd.f32 %v1483, %v1486
        %vm1488 = vweird.f32 %v1483
        %v1489 = vsel %vm1488, %v1483, %v1487
        %v1490 = vmul.f32 %v1482, %v1489
        %v1491 = vsub.f32 %v1477, %v1490
        %v1492 = vmul.f32 %v1491, %v1491
        %v1493 = vsel %vm1069, %v1492, 0.0
        %1494 = vadd.xlane.f32.xlu0 %v1493
        %v1495 = vpop.xlane.xlu0 %1494
        %v1496 = vmul.f32 %v1495, %v1489
        %v1497 = vadd.f32 %v1496, 1e-12
        %v1498 = vrsqrt.pop %v1497
        %v1499 = vmul.f32 %v1498, %v1497
        %v1500 = vmul.f32 %v1499, %v1498
        %v1501 = vmul.f32 0.5, %v1500
        %v1502 = vsub.f32 1.5, %v1501
        %v1503 = vmul.f32 %v1498, %v1502
        %vm1504 = vweird.f32 %v1497
        %vm1505 = vweird.f32 %v1498
        %vm1506 = vmor %vm1504, %vm1505
        %v1507 = vsel %vm1506, %v1498, %v1503
        %v1508 = vmul.f32 %v1491, %v1507
        %v1510 = vperm.slane %v1478, 0
        %v1512 = vmul.f32 %v1508, %v1510
        %v1514 = vperm.slane %v1479, 0
        %v1516 = vadd.f32 %v1512, %v1514
        %v1517 = vpack.c.bf16 %v1516, %v1516
        %v1518 = vld [vmem:[%s860] sm:$0xf]
        %v1519 = vld [vmem:[%s860 + $0x4] sm:$0xf]
        %v1520 = vld [vmem:[%s860 + $0x8] sm:$0xf]
        %v1521 = vld [vmem:[%s860 + $0xc] sm:$0xf]
        %v1522 = vld [vmem:[%s1027] sm:$0x1]
        %v1524 = vperm.slane %v1522, 0
        %v1530 = vunpack.c.l.b16 %v1518
        %v1531 = vunpack.c.l.b16 %v1519
        %v1532 = vunpack.c.l.b16 %v1520
        %v1533 = vunpack.c.l.b16 %v1521
        %v1534 = vpack.c.b16 %v1531, %v1530
        %v1535 = vpack.c.b16 %v1533, %v1532
        %v1539 = vsel %vm1069, %v1517, 0
        %1541 = vmatpush.bf16.msra.mxu0 0
        %1542 = vmatpush.bf16.msra.mxu0 0
        %1543 = vmatpush.bf16.msra.mxu0 0
        %1544 = vmatpush.bf16.msra.mxu0 0
        %1545 = vmatpush.bf16.msra.mxu0 0
        %1546 = vmatpush.bf16.msra.mxu0 0
        %1547 = vmatpush.bf16.msra.mxu0 %v1535
        %1548 = vmatpush.bf16.msra.mxu0 %v1534
        %1549 = vmatmul.bf16.gmra.mxu0 %v1539
        %v1550 = vpop.f32.mrf.mxu0
        %v1551 = vadd.f32 %v1524, %v1550
        %v1552 = vpop.f32.mrf.mxu0
        %1553 = vdwg.mxu0
        %v1554 = vmul.f32 %v1551, 0.5
        %v1555 = vmul.f32 %v1551, 0.70710677
        %v1556 = vmul.f32 %v1555, %v1555
        %v1557 = vmin.f32 16.0, %v1556
        %v1558 = vmul.f32 %v1557, 2.1237322e-06
        %v1559 = vadd.f32 %v1558, 0.00028619796
        %v1560 = vmul.f32 %v1557, %v1559
        %v1561 = vadd.f32 %v1560, 0.0036580483
        %v1562 = vmul.f32 %v1557, %v1561
        %v1563 = vadd.f32 %v1562, 0.05243302
        %v1564 = vmul.f32 %v1557, %v1563
        %v1565 = vadd.f32 %v1564, 0.18741608
        %v1566 = vmul.f32 %v1557, %v1565
        %v1567 = vadd.f32 %v1566, 1.1283791
        %v1568 = vmul.f32 %v1555, %v1567
        %v1569 = vmul.f32 %v1557, 3.8918573e-05
        %v1570 = vadd.f32 %v1569, 0.001143296
        %v1571 = vmul.f32 %v1557, %v1570
        %v1572 = vadd.f32 %v1571, 0.014752088
        %v1573 = vmul.f32 %v1557, %v1572
        %v1574 = vadd.f32 %v1573, 0.112945676
        %v1575 = vmul.f32 %v1557, %v1574
        %v1576 = vadd.f32 %v1575, 0.4994258
        %v1577 = vmul.f32 %v1557, %v1576
        %v1578 = vadd.f32 %v1577, 1.0
        %v1579 = vrcp.pop %v1578
        %v1580 = vmul.f32 %v1578, %v1579
        %v1581 = vsub.f32 1.0, %v1580
        %v1582 = vmul.f32 %v1579, %v1581
        %v1583 = vadd.f32 %v1579, %v1582
        %vm1584 = vweird.f32 %v1578
        %vm1585 = vweird.f32 %v1579
        %vm1586 = vmor %vm1584, %vm1585
        %v1587 = vsel %vm1586, %v1579, %v1583
        %v1588 = vand.u32 2147483647, %v1578
        %vm1589 = vcmp.eq.f32.partialorder %v1588, 8.507059e+37
        %v1590 = vand.u32 %v1578, 2147483648
        %v1591 = vor.u32 1.1754944e-38, %v1590
        %v1592 = vsel %vm1589, %v1591, %v1587
        %v1593 = vmul.f32 %v1568, %v1592
        %v1594 = vmin.f32 %v1593, 1.0
        %v1595 = vmax.f32 %v1594, -1.0
        %v1596 = vadd.f32 %v1595, 1.0
        %v1597 = vmul.f32 %v1554, %v1596
        %v1598 = vpack.c.bf16 %v1597, %v1597
        %v1599 = vld [vmem:[%s1032] sm:$0xf]
        %v1600 = vld [vmem:[%s1032 + $0x4] sm:$0xf]
        %v1601 = vld [vmem:[%s1032 + $0x8] sm:$0xf]
        %v1602 = vld [vmem:[%s1032 + $0xc] sm:$0xf]
        %v1603 = vld [vmem:[%s1032 + $0x10] sm:$0xf]
        %v1604 = vld [vmem:[%s1032 + $0x14] sm:$0xf]
        %v1605 = vld [vmem:[%s1032 + $0x18] sm:$0xf]
        %v1606 = vld [vmem:[%s1032 + $0x1c] sm:$0xf]
        %v1607 = vld [vmem:[%s1035] sm:$0x1]
        %v1609 = vperm.slane %v1607, 0
        %v1619 = vunpack.c.l.b16 %v1599
        %v1620 = vunpack.c.l.b16 %v1600
        %v1621 = vunpack.c.l.b16 %v1601
        %v1622 = vunpack.c.l.b16 %v1602
        %v1623 = vunpack.c.l.b16 %v1603
        %v1624 = vunpack.c.l.b16 %v1604
        %v1625 = vunpack.c.l.b16 %v1605
        %v1626 = vunpack.c.l.b16 %v1606
        %v1627 = vpack.c.b16 %v1620, %v1619
        %v1628 = vpack.c.b16 %v1622, %v1621
        %v1629 = vpack.c.b16 %v1624, %v1623
        %v1630 = vpack.c.b16 %v1626, %v1625
        %vm1635 = vcmask 523264
        %v1637 = vsel %vm1635, %v1598, 0
        %1639 = vmatpush.bf16.msra.mxu0 0
        %1640 = vmatpush.bf16.msra.mxu0 0
        %1641 = vmatpush.bf16.msra.mxu0 0
        %1642 = vmatpush.bf16.msra.mxu0 0
        %1643 = vmatpush.bf16.msra.mxu0 %v1630
        %1644 = vmatpush.bf16.msra.mxu0 %v1629
        %1645 = vmatpush.bf16.msra.mxu0 %v1628
        %1646 = vmatpush.bf16.msra.mxu0 %v1627
        %1647 = vmatmul.bf16.gmra.mxu0 %v1637
        %v1648 = vpop.f32.mrf.mxu0
        %v1649 = vadd.f32 %v1609, %v1648
        %v1650 = vpop.f32.mrf.mxu0
        %1651 = vdwg.mxu0
        %v1652 = vadd.f32 %v1649, %v1516
        %v1653 = vld [vmem:[%s869] sm:$0x1]
        %v1654 = vld [vmem:[%s1038] sm:$0x1]
        %v1655 = vsel %vm1069, %v1652, 0.0
        %1656 = vadd.xlane.f32.xlu0 %v1655
        %v1657 = vpop.xlane.xlu0 %1656
        %v1658 = vmul.f32 %v1657, %v1489
        %v1659 = vsub.f32 %v1652, %v1658
        %v1660 = vmul.f32 %v1659, %v1659
        %v1661 = vsel %vm1069, %v1660, 0.0
        %1662 = vadd.xlane.f32.xlu0 %v1661
        %v1663 = vpop.xlane.xlu0 %1662
        %v1664 = vmul.f32 %v1663, %v1489
        %v1665 = vadd.f32 %v1664, 1e-12
        %v1666 = vrsqrt.pop %v1665
        %v1667 = vmul.f32 %v1666, %v1665
        %v1668 = vmul.f32 %v1667, %v1666
        %v1669 = vmul.f32 0.5, %v1668
        %v1670 = vsub.f32 1.5, %v1669
        %v1671 = vmul.f32 %v1666, %v1670
        %vm1672 = vweird.f32 %v1665
        %vm1673 = vweird.f32 %v1666
        %vm1674 = vmor %vm1672, %vm1673
        %v1675 = vsel %vm1674, %v1666, %v1671
        %v1676 = vmul.f32 %v1659, %v1675
        %v1678 = vperm.slane %v1653, 0
        %v1680 = vmul.f32 %v1676, %v1678
        %v1682 = vperm.slane %v1654, 0
        %v1684 = vadd.f32 %v1680, %v1682
        %1685 = vst.msk [vmem:[#allocation2] sm:$0xff] %vm1069, %v1684
        %p1686 = scmp.eq.s32.totalorder %s50, 1
        // Predicated region
        $region129: #{tpu_custom_call.1} parent=95 // pred_check
          %p1687 = pneg %p1686
        $region130: #{tpu_custom_call.1} parent=95 // pred_check_branch
          %1689 = sbr.rel (%p1687) target = $region132
        $region131: #{tpu_custom_call.1} parent=95 // pred_region
          %1690 = vst.msk [vmem:[%s994] sm:$0xff] %vm1069, %v1684
        $region132: #{tpu_custom_call.1} parent=95 // pred_fallthru
          _
        %s1691 = sand.u32 %s559, 1
        %s1692 = scalar_lea.sflag [#allocation6], %s1691
        %s1693 = sand.u32 %s559, 1
        %s1694 = smul.addr %s1693, 8
        %s1695 = scalar_lea.vmem [#allocation16], %s1694
        // Predicated region
        $region133: #{tpu_custom_call.1} parent=95 // pred_check
          %p1696 = pneg %p569
        $region134: #{tpu_custom_call.1} parent=95 // pred_check_branch
          %1698 = sbr.rel (%p1696) target = $region136
        $region135: #{tpu_custom_call.1} parent=95 // pred_region
          %1700 = vsyncadd %s1692, 0
          %s1701 = smul.addr %s49, 8
          %s1702 = scalar_lea.hbm %s19, %s1701
          %s1704 = sshll.u32 %s1695, 4
          %s1705 = int_to_ptr.vmem [resolvable:$true] %s1704
          %s1706 = sshll.u32 %s1702, 4
          %s1707 = int_to_ptr.hbm [resolvable:$true] %s1706
          %1709 = dma.vmem_to_hbm [thread:$0]  %s1705, 128, %s1707, %s1692
        $region136: #{tpu_custom_call.1} parent=95 // pred_fallthru
          _
      $region96: #{tpu_custom_call.1} parent=5 // pred_fallthru
        _
      %p1710 = scmp.le.s32.totalorder 2, %s40
      // Predicated region
      $region137: #{tpu_custom_call.1} parent=5 // pred_check
        %p1711 = pneg %p1710
      $region138: #{tpu_custom_call.1} parent=5 // pred_check_branch
        %1713 = sbr.rel (%p1711) target = $region140
      $region139: #{tpu_custom_call.1} parent=5 // pred_region
        %s1714 = ssub.s32 %s40, 2
        // Predicated region
        $region141: #{tpu_custom_call.1} parent=139 // pred_check
          %p1715 = pneg %p575
        $region142: #{tpu_custom_call.1} parent=139 // pred_check_branch
          %1717 = sbr.rel (%p1715) target = $region144
        $region143: #{tpu_custom_call.1} parent=139 // pred_region
          %s1718 = sand.u32 %s560, 1
          %s1719 = scalar_lea.sflag [#allocation6], %s1718
          %s1720 = sand.u32 %s560, 1
          %s1721 = smul.addr %s1720, 8
          %s1722 = scalar_lea.vmem [#allocation16], %s1721
          %1724 = dma.done %s1719, 128
        $region144: #{tpu_custom_call.1} parent=139 // pred_fallthru
          _
      $region140: #{tpu_custom_call.1} parent=5 // pred_fallthru
        _
    $region6: #{tpu_custom_call.1} parent=1 // loop_footer
      %s44 = sadd.s32 1, %s40
    $region7: #{tpu_custom_call.1} parent=1 // loop_footer_branch
      %39 = sbr.rel target = $region3
    $region8: #{tpu_custom_call.1} parent=1 // loop_exit
      _
    %1725 = vsyncpa [#allocation5], 1
    %s1726 = scalar_lea.sflag [#allocation5], 1
    %1727 = vsyncpa %s1726, 1
    %1728 = vsyncpa [#allocation8], 1
    %s1729 = scalar_lea.sflag [#allocation8], 1
    %1730 = vsyncpa %s1729, 1
    %1731 = vsyncpa [#allocation11], 1
    %s1732 = scalar_lea.sflag [#allocation11], 1
    %1733 = vsyncpa %s1732, 1
    %1734 = vsyncpa [#allocation14], 1
    %s1735 = scalar_lea.sflag [#allocation14], 1
    %1736 = vsyncpa %s1735, 1
    %1737 = vsyncpa [#allocation6], 1
    %s1738 = scalar_lea.sflag [#allocation6], 1
    %1739 = vsyncpa %s1738, 1

</llo_original>
